<compile_context>
chip_gen: v7x
topology: tpu7x:2x2x1
jax: 0.10.0
libtpu: 0.0.40
codegen_flags: <defaults>
</compile_context>

<pallas_src>
import functools

import jax
import jax.numpy as jnp
from jax import lax
from jax.experimental import pallas as pl
from jax.experimental.pallas import tpu as pltpu


def _convlstm_kernel(xcol_ref, w_ref, b_ref, cprev_ref, peep_ifg_ref, wco_ref,
                     hc_ref):
    """One row tile: conv-as-single-matmul + lane-packed LSTM gate math."""
    cout = cprev_ref.shape[-1]

    # Single MXU contraction, K padded to a lane multiple; bf16 in, f32 acc.
    conv = jnp.dot(xcol_ref[...], w_ref[...],
                   preferred_element_type=jnp.float32)
    conv = conv + b_ref[...]                              # (tm, 4*cout) f32

    c_prev = cprev_ref[...]                               # (tm, cout) f32

    # Lane-packed i|f|g pre-activations: one VPU mul/add pass and ONE sigmoid
    # over (tm, 3*cout).  g-gate weight/bias columns were pre-scaled by 2 and
    # the g peephole columns are zero, so tanh(g) = 2*sigmoid(2g) - 1 comes
    # from the same sigmoid.  The c_prev broadcast is an XLU op (slack slot).
    c3 = jnp.concatenate([c_prev, c_prev, c_prev], axis=-1)
    sig = jax.nn.sigmoid(conv[:, :3 * cout] + peep_ifg_ref[...] * c3)

    input_gate = sig[:, 0 * cout:1 * cout]
    forget_gate = sig[:, 1 * cout:2 * cout]
    g_act = 2.0 * sig[:, 2 * cout:3 * cout] - 1.0         # tanh(C_conv)

    c_new = forget_gate * c_prev + input_gate * g_act
    output_gate = jax.nn.sigmoid(conv[:, 3 * cout:] + wco_ref[...] * c_new)
    h_new = output_gate * jnp.tanh(c_new)

    # Lane-dense fused store: h||c in 2*cout lanes, single output pipeline.
    hc_ref[...] = jnp.concatenate([h_new, c_new], axis=-1)


def prepare_params(conv_w, conv_b, W_ci, W_cf, W_co):
    """Constant layout work, hoisted so a timestep loop pays it once.

    conv_w (4*Cout, Cin+Cout, KH, KW) -> (pad128(KH*KW*(Cin+Cout)), 4*Cout) bf16
      with the g-gate columns (and bias) pre-scaled by 2 (exact; power of two)
      to enable the tanh-via-sigmoid fusion in-kernel.
    W_ci/W_cf -> combined [W_ci | W_cf | 0] slab of shape (H*W, 3*Cout) f32.
    W_co      -> (H*W, Cout) f32.
    """
    four_cout, cic, kh, kw = conv_w.shape
    cout = four_cout // 4
    kdim = kh * kw * cic
    kdim_padded = ((kdim + 127) // 128) * 128

    w2d = jnp.transpose(conv_w, (2, 3, 1, 0)).reshape(kdim, four_cout)
    g_scale = jnp.concatenate([jnp.ones((2 * cout,), jnp.float32),
                               jnp.full((cout,), 2.0, jnp.float32),
                               jnp.ones((cout,), jnp.float32)])
    w2d = (w2d * g_scale[None, :]).astype(jnp.bfloat16)
    w2d = jnp.pad(w2d, ((0, kdim_padded - kdim), (0, 0)))   # K: 324 -> 384
    b2d = (conv_b.astype(jnp.float32) * g_scale).reshape(1, four_cout)

    def peep(w):
        return jnp.transpose(w, (1, 2, 0)).reshape(-1, w.shape[0]).astype(
            jnp.float32)

    wci, wcf, wco = peep(W_ci), peep(W_cf), peep(W_co)
    peep_ifg = jnp.concatenate([wci, wcf, jnp.zeros_like(wci)], axis=-1)
    return w2d, b2d, peep_ifg, wco, kdim_padded


def _pick_row_tile(M, requested):
    """Largest row tile <= requested that divides M, keeps (8,*) alignment and
    leaves >= 2 grid tiles (megacore) when M is big enough."""
    tm = min(requested, M)
    if tm >= M and M >= 16:
        tm = M // 2
    while tm > 8 and (M % tm != 0 or tm % 8 != 0):
        tm -= 8
    if M % tm != 0 or (tm % 8 != 0 and tm != M):
        tm = M
    return tm


def _peep_layout(peep_hw, M, tm, hw):
    """Array + BlockSpec for a per-spatial-position parameter (hw rows) so each
    tm-row tile of the (B*H*W)-flattened rows sees the right slice with minimal
    re-DMA."""
    n = peep_hw.shape[-1]
    if tm % hw == 0:
        # One block, constant index_map -> stays resident in VMEM.
        return (jnp.tile(peep_hw, (tm // hw, 1)),
                pl.BlockSpec((tm, n), lambda i: (0, 0)))
    if hw % tm == 0:
        pw_blocks = hw // tm
        return (peep_hw,
                pl.BlockSpec((tm, n), lambda i: (i % pw_blocks, 0)))
    # Fallback: materialize a per-row copy (always correct, extra traffic).
    return (jnp.tile(peep_hw, (M // hw, 1)),
            pl.BlockSpec((tm, n), lambda i: (i, 0)))


def convlstm_cell_step(x_nhwc, h_nhwc, c_nhwc, params, *, kernel_size, padding,
                       row_tile=512):
    """One ConvLSTM cell step on NHWC activations. Returns (H, C) in NHWC."""
    w2d, b2d, peep_ifg, wco2d, kdim_padded = params
    B, H, W, _ = x_nhwc.shape
    cout = h_nhwc.shape[-1]
    K = kernel_size
    hw = H * W

    hout = H + 2 * padding - K + 1
    wout = W + 2 * padding - K + 1
    # Peephole weights are sized to frame_size == (H, W): the module only makes
    # sense for a same-size conv output (stride 1, padding == (K-1)//2).
    assert (hout, wout) == (H, W), "ConvLSTMCell needs same-size conv output"

    # concat + pad + im2col: shifted views -> one (M, pad128(K*K*Cic)) slab.
    # TODO(synk): for large frames / long rollouts (esp. v5e) replace this 9x
    # materialized slab with an in-kernel halo DMA (memory_space=pl.ANY +
    # pltpu.make_async_copy) to cut per-step HBM activation traffic ~9x.
    inp = jnp.concatenate([x_nhwc, h_nhwc], axis=-1)
    inp = jnp.pad(inp, ((0, 0), (padding, padding), (padding, padding), (0, 0)))
    cols = [inp[:, dh:dh + H, dw:dw + W, :]
            for dh in range(K) for dw in range(K)]
    x_col = jnp.concatenate(cols, axis=-1).reshape(B * hw, -1)
    kdim = x_col.shape[-1]
    x_col = jnp.pad(x_col.astype(jnp.bfloat16),
                    ((0, 0), (0, kdim_padded - kdim)))

    c_prev2d = c_nhwc.reshape(B * hw, cout).astype(jnp.float32)

    M = B * hw
    tm = _pick_row_tile(M, row_tile)

    peep_ifg_arr, peep_ifg_spec = _peep_layout(peep_ifg, M, tm, hw)
    wco_arr, wco_spec = _peep_layout(wco2d, M, tm, hw)

    tile_spec = pl.BlockSpec((tm, cout), lambda i: (i, 0))

    # Note: if a trace ever shows exposed input DMA at large M, bump the x_col
    # spec to pipeline_mode=pl.Buffered(3); default depth is fine at tm>=512.
    hc2d = pl.pallas_call(
        _convlstm_kernel,
        out_shape=jax.ShapeDtypeStruct((M, 2 * cout), jnp.float32),
        grid=(M // tm,),
        in_specs=[
            pl.BlockSpec((tm, kdim_padded), lambda i: (i, 0)),        # im2col
            pl.BlockSpec((kdim_padded, 4 * cout), lambda i: (0, 0)),  # weights
            pl.BlockSpec((1, 4 * cout), lambda i: (0, 0)),            # bias
            tile_spec,                                                # c_prev
            peep_ifg_spec,                                            # [Wci|Wcf|0]
            wco_spec,                                                 # W_co
        ],
        out_specs=pl.BlockSpec((tm, 2 * cout), lambda i: (i, 0)),     # h||c
        compiler_params=pltpu.CompilerParams(
            dimension_semantics=("parallel",)),
    )(x_col, w2d, b2d, c_prev2d, peep_ifg_arr, wco_arr)

    h2d = hc2d[:, :cout]
    c2d = hc2d[:, cout:]
    return (h2d.reshape(B, H, W, cout), c2d.reshape(B, H, W, cout))


def convlstm_cell_nchw(X, H_prev, C_prev, conv_w, conv_b, W_ci, W_cf, W_co,
                       *, kernel_size, padding):
    """PyTorch-layout convenience wrapper (NCHW in / NCHW out). In a real
    recurrent loop, keep state in NHWC and call convlstm_cell_step directly."""
    params = prepare_params(conv_w, conv_b, W_ci, W_cf, W_co)
    x_nhwc = jnp.transpose(X, (0, 2, 3, 1))
    h_nhwc = jnp.transpose(H_prev, (0, 2, 3, 1))
    c_nhwc = jnp.transpose(C_prev, (0, 2, 3, 1))
    h_new, c_new = convlstm_cell_step(x_nhwc, h_nhwc, c_nhwc, params,
                                      kernel_size=kernel_size, padding=padding)
    return (jnp.transpose(h_new, (0, 3, 1, 2)),
            jnp.transpose(c_new, (0, 3, 1, 2)))


def reference(X, H_prev, C_prev, conv_w, conv_b, W_ci, W_cf, W_co, padding):
    """Pure-JAX f32 reference matching the PyTorch forward (NCHW)."""
    inp = jnp.concatenate([X, H_prev], axis=1)
    conv = lax.conv_general_dilated(
        inp, conv_w, window_strides=(1, 1),
        padding=[(padding, padding), (padding, padding)],
        dimension_numbers=('NCHW', 'OIHW', 'NCHW'),
        precision=lax.Precision.HIGHEST)
    conv = conv + conv_b[None, :, None, None]
    i_c, f_c, c_c, o_c = jnp.split(conv, 4, axis=1)
    ig = jax.nn.sigmoid(i_c + W_ci[None] * C_prev)
    fg = jax.nn.sigmoid(f_c + W_cf[None] * C_prev)
    C = fg * C_prev + ig * jnp.tanh(c_c)
    og = jax.nn.sigmoid(o_c + W_co[None] * C)
    H = og * jnp.tanh(C)
    return H, C


if __name__ == "__main__":
    # Module config: in_channels=4, out_channels=32, kernel_size=3, padding=1,
    # activation='tanh', frame_size=(16, 16); batch=2.
    B, Cin, Cout, Hs, Ws, K, PAD = 2, 4, 32, 16, 16, 3, 1
    key = jax.random.PRNGKey(0)
    k = jax.random.split(key, 8)

    X = jax.random.normal(k[0], (B, Cin, Hs, Ws), jnp.float32)
    H_prev = jax.random.normal(k[1], (B, Cout, Hs, Ws), jnp.float32)
    C_prev = jax.random.normal(k[2], (B, Cout, Hs, Ws), jnp.float32)

    # Deterministic parameter init (shapes per nn.Conv2d / nn.Parameter).
    fan_in = (Cin + Cout) * K * K
    fan_out = 4 * Cout * K * K
    xavier_bound = (6.0 / (fan_in + fan_out)) ** 0.5
    conv_w = jax.random.uniform(k[3], (4 * Cout, Cin + Cout, K, K),
                                jnp.float32, -xavier_bound, xavier_bound)
    conv_b = jnp.zeros((4 * Cout,), jnp.float32)
    W_ci = jax.random.uniform(k[4], (Cout, Hs, Ws), jnp.float32, -0.1, 0.1)
    W_cf = jax.random.uniform(k[5], (Cout, Hs, Ws), jnp.float32, -0.1, 0.1)
    W_co = jax.random.uniform(k[6], (Cout, Hs, Ws), jnp.float32, -0.1, 0.1)

    cell = jax.jit(functools.partial(convlstm_cell_nchw,
                                     kernel_size=K, padding=PAD))
    H_out, C_out = cell(X, H_prev, C_prev, conv_w, conv_b, W_ci, W_cf, W_co)
    jax.block_until_ready((H_out, C_out))

    H_ref, C_ref = reference(X, H_prev, C_prev, conv_w, conv_b,
                             W_ci, W_cf, W_co, PAD)
    # Tolerance sized for bf16 MXU operands vs the f32 HIGHEST reference
    # (the tanh-via-sigmoid fusion itself is ~1 ulp in f32).
    assert jnp.allclose(H_out, H_ref, atol=2e-2, rtol=2e-2)
    assert jnp.allclose(C_out, C_ref, atol=2e-2, rtol=2e-2)

    print("KERNEL_OK")
</pallas_src>

<mosaic_0001>
module attributes {stable_mosaic.version = 11 : i64} {
  func.func @_convlstm_kernel(%arg0: i32, %arg1: memref<256x384xbf16, #tpu.memory_space<vmem>>, %arg2: memref<384x128xbf16, #tpu.memory_space<vmem>>, %arg3: memref<1x128xf32, #tpu.memory_space<vmem>>, %arg4: memref<256x32xf32, #tpu.memory_space<vmem>>, %arg5: memref<256x96xf32, #tpu.memory_space<vmem>>, %arg6: memref<256x32xf32, #tpu.memory_space<vmem>>, %arg7: memref<256x64xf32, #tpu.memory_space<vmem>>) attributes {dimension_semantics = [#tpu.dimension_semantics<parallel>], iteration_bounds = array<i64: 2>, scalar_prefetch = 0 : i64, scratch_operands = 0 : i64, tpu.core_type = #tpu.core_type<tc>, window_params = [{transform_indices = @transform_0, window_bounds = array<i64: 256, 384>}, {pipeline_mode = #tpu.pipeline_mode<synchronous>, transform_indices = @transform_1, window_bounds = array<i64: 384, 128>}, {pipeline_mode = #tpu.pipeline_mode<synchronous>, transform_indices = @transform_2, window_bounds = array<i64: 1, 128>}, {transform_indices = @transform_3, window_bounds = array<i64: 256, 32>}, {pipeline_mode = #tpu.pipeline_mode<synchronous>, transform_indices = @transform_4, window_bounds = array<i64: 256, 96>}, {pipeline_mode = #tpu.pipeline_mode<synchronous>, transform_indices = @transform_5, window_bounds = array<i64: 256, 32>}, {transform_indices = @transform_6, window_bounds = array<i64: 256, 64>}]} {
    %c0 = arith.constant 0 : index
    %c0_0 = arith.constant 0 : index
    %0 = vector.load %arg1[%c0, %c0_0] : memref<256x384xbf16, #tpu.memory_space<vmem>>, vector<256x384xbf16>
    %c0_1 = arith.constant 0 : index
    %c0_2 = arith.constant 0 : index
    %1 = vector.load %arg2[%c0_1, %c0_2] : memref<384x128xbf16, #tpu.memory_space<vmem>>, vector<384x128xbf16>
    %cst = arith.constant dense<0.000000e+00> : vector<256x128xf32>
    %2 = tpu.matmul %0, %1, %cst {dimension_numbers = #tpu.dot_dimension_numbers<[1], [0], [0], [1], [0, 0, 1, 1], [], []>} : vector<256x384xbf16>, vector<384x128xbf16>, vector<256x128xf32> -> vector<256x128xf32>
    %c0_3 = arith.constant 0 : index
    %c0_4 = arith.constant 0 : index
    %3 = vector.load %arg3[%c0_3, %c0_4] : memref<1x128xf32, #tpu.memory_space<vmem>>, vector<1x128xf32>
    %4 = vector.broadcast %3 : vector<1x128xf32> to vector<256x128xf32>
    %5 = arith.addf %2, %4 : vector<256x128xf32>
    %c0_5 = arith.constant 0 : index
    %c0_6 = arith.constant 0 : index
    %6 = vector.load %arg4[%c0_5, %c0_6] : memref<256x32xf32, #tpu.memory_space<vmem>>, vector<256x32xf32>
    %7 = tpu.concatenate %6, %6, %6 in 1 : vector<256x32xf32>, vector<256x32xf32>, vector<256x32xf32> -> vector<256x96xf32>
    %8 = vector.extract_strided_slice %5 {offsets = [0, 0], sizes = [256, 96], strides = [1, 1]} : vector<256x128xf32> to vector<256x96xf32>
    %c0_7 = arith.constant 0 : index
    %c0_8 = arith.constant 0 : index
    %9 = vector.load %arg5[%c0_7, %c0_8] : memref<256x96xf32, #tpu.memory_space<vmem>>, vector<256x96xf32>
    %10 = arith.mulf %9, %7 : vector<256x96xf32>
    %11 = arith.addf %8, %10 : vector<256x96xf32>
    %12 = arith.negf %11 : vector<256x96xf32>
    %13 = math.exp %12 : vector<256x96xf32>
    %cst_9 = arith.constant 1.000000e+00 : f32
    %14 = vector.broadcast %cst_9 : f32 to vector<256x96xf32>
    %15 = arith.addf %14, %13 : vector<256x96xf32>
    %16 = arith.divf %14, %15 : vector<256x96xf32>
    %17 = vector.extract_strided_slice %16 {offsets = [0, 0], sizes = [256, 32], strides = [1, 1]} : vector<256x96xf32> to vector<256x32xf32>
    %18 = vector.extract_strided_slice %16 {offsets = [0, 32], sizes = [256, 32], strides = [1, 1]} : vector<256x96xf32> to vector<256x32xf32>
    %19 = vector.extract_strided_slice %16 {offsets = [0, 64], sizes = [256, 32], strides = [1, 1]} : vector<256x96xf32> to vector<256x32xf32>
    %cst_10 = arith.constant 2.000000e+00 : f32
    %20 = vector.broadcast %cst_10 : f32 to vector<256x32xf32>
    %21 = arith.mulf %20, %19 : vector<256x32xf32>
    %cst_11 = arith.constant 1.000000e+00 : f32
    %22 = vector.broadcast %cst_11 : f32 to vector<256x32xf32>
    %23 = arith.subf %21, %22 : vector<256x32xf32>
    %24 = arith.mulf %18, %6 : vector<256x32xf32>
    %25 = arith.mulf %17, %23 : vector<256x32xf32>
    %26 = arith.addf %24, %25 : vector<256x32xf32>
    %27 = vector.extract_strided_slice %5 {offsets = [0, 96], sizes = [256, 32], strides = [1, 1]} : vector<256x128xf32> to vector<256x32xf32>
    %c0_12 = arith.constant 0 : index
    %c0_13 = arith.constant 0 : index
    %28 = vector.load %arg6[%c0_12, %c0_13] : memref<256x32xf32, #tpu.memory_space<vmem>>, vector<256x32xf32>
    %29 = arith.mulf %28, %26 : vector<256x32xf32>
    %30 = arith.addf %27, %29 : vector<256x32xf32>
    %31 = arith.negf %30 : vector<256x32xf32>
    %32 = math.exp %31 : vector<256x32xf32>
    %cst_14 = arith.constant 1.000000e+00 : f32
    %33 = vector.broadcast %cst_14 : f32 to vector<256x32xf32>
    %34 = arith.addf %33, %32 : vector<256x32xf32>
    %35 = arith.divf %33, %34 : vector<256x32xf32>
    %36 = math.tanh %26 : vector<256x32xf32>
    %37 = arith.mulf %35, %36 : vector<256x32xf32>
    %38 = tpu.concatenate %37, %26 in 1 : vector<256x32xf32>, vector<256x32xf32> -> vector<256x64xf32>
    %c0_15 = arith.constant 0 : index
    %c0_16 = arith.constant 0 : index
    %39 = vector.load %arg7[%c0_15, %c0_16] : memref<256x64xf32, #tpu.memory_space<vmem>>, vector<256x64xf32>
    tpu.vector_store %arg7[%c0_15, %c0_16], %38 {strides = array<i32>} : memref<256x64xf32, #tpu.memory_space<vmem>>, vector<256x64xf32>,
    return
  }
  func.func @transform_0(%arg0: i32) -> (i32, i32) {
    %c0_i32 = arith.constant 0 : i32
    %c0_i32_0 = arith.constant 0 : i32
    return %arg0, %c0_i32 : i32, i32
  }
  func.func @transform_1(%arg0: i32) -> (i32, i32) {
    %c0_i32 = arith.constant 0 : i32
    %c0_i32_0 = arith.constant 0 : i32
    %c0_i32_1 = arith.constant 0 : i32
    return %c0_i32, %c0_i32_0 : i32, i32
  }
  func.func @transform_2(%arg0: i32) -> (i32, i32) {
    %c0_i32 = arith.constant 0 : i32
    %c0_i32_0 = arith.constant 0 : i32
    %c0_i32_1 = arith.constant 0 : i32
    return %c0_i32, %c0_i32_0 : i32, i32
  }
  func.func @transform_3(%arg0: i32) -> (i32, i32) {
    %c0_i32 = arith.constant 0 : i32
    %c0_i32_0 = arith.constant 0 : i32
    return %arg0, %c0_i32 : i32, i32
  }
  func.func @transform_4(%arg0: i32) -> (i32, i32) {
    %c0_i32 = arith.constant 0 : i32
    %c0_i32_0 = arith.constant 0 : i32
    %c0_i32_1 = arith.constant 0 : i32
    return %c0_i32, %c0_i32_0 : i32, i32
  }
  func.func @transform_5(%arg0: i32) -> (i32, i32) {
    %c0_i32 = arith.constant 0 : i32
    %c0_i32_0 = arith.constant 0 : i32
    %c0_i32_1 = arith.constant 0 : i32
    return %c0_i32, %c0_i32_0 : i32, i32
  }
  func.func @transform_6(%arg0: i32) -> (i32, i32) {
    %c0_i32 = arith.constant 0 : i32
    %c0_i32_0 = arith.constant 0 : i32
    return %arg0, %c0_i32 : i32, i32
  }
}

</mosaic_0001>

<llo_original>
// kernel: convlstm_cell_nchw.1
$region0: #{convlstm_cell_nchw.1}
  #allocation0 [shape = 'u32[]', space=smem, size = 0x4, offset = 0x4, fixed_abs, tag = 'smem constant byte address 0x4 - core index']
  #allocation1 [shape = 'u32[144,128]{1,0:T(1,128)}', space=vmem, size = 0x12000, scoped, tag = 'internal scratch']
  %s0 = inlined_call_operand.vmem [shape: bf16[512,384], index: 0, kind: input, shape index: {}]
  %s1 = inlined_call_operand.vmem [shape: bf16[384,128], index: 1, kind: input, shape index: {}]
  %s2 = inlined_call_operand.vmem [shape: f32[1,128], index: 2, kind: input, shape index: {}]
  %s3 = inlined_call_operand.vmem [shape: f32[512,32], index: 3, kind: input, shape index: {}]
  %s4 = inlined_call_operand.vmem [shape: f32[256,96], index: 4, kind: input, shape index: {}]
  %s5 = inlined_call_operand.vmem [shape: f32[256,32], index: 5, kind: input, shape index: {}]
  %s6 = inlined_call_operand.vmem [shape: f32[512,64], index: 6, kind: output, shape index: {}]
  %s7 = sld [smem:[#allocation0]]
  $region57: #{convlstm_cell_nchw.1} parent=0
    _
  %s9 = ssub.s32 1, %s7
  %s10 = scalar_select 0, %s9, %s7
  loop: start=0, step=1, limit=4
  $region2: #{convlstm_cell_nchw.1} parent=0 // loop_pre_header
    _
  $region3: #{convlstm_cell_nchw.1} parent=0 // loop_header
    %s12 = sphi 0, %s16
    %p13 = scmp.ge.s32.totalorder %s12, 4
    %s22 = sphi 0, %s24
    %s25 = sphi 0, %s22
    %s26 = sphi 0, %s25
    %s42 = sphi 0, %s26
    %s46 = sphi 0, %s46
    %s48 = sphi 0, %s46
    %s49 = sphi 0, %s48
    %s63 = sphi 0, %s49
    %s67 = sphi 0, %s67
    %s69 = sphi 0, %s67
    %s70 = sphi 0, %s69
    %s84 = sphi 0, %s70
    %s90 = sphi 0, %s92
    %s93 = sphi 0, %s90
    %s94 = sphi 0, %s93
    %s110 = sphi 0, %s94
    %s114 = sphi 0, %s114
    %s116 = sphi 0, %s114
    %s117 = sphi 0, %s116
    %s131 = sphi 0, %s117
    %s135 = sphi 0, %s135
    %s137 = sphi 0, %s135
    %s138 = sphi 0, %s137
    %s152 = sphi 0, %s138
    %s158 = sphi 0, %s160
    %s161 = sphi 0, %s158
    %s162 = sphi 0, %s161
    %s178 = sphi 0, %s162
  $region4: #{convlstm_cell_nchw.1} parent=0 // loop_header_branch
    %15 = sbr.rel (%p13) target = $region8
  $region5: #{convlstm_cell_nchw.1} parent=0 // loop_body
    %s17 = ssub.s32 %s12, 1
    %s18 = ssub.s32 %s12, 2
    %s19 = sadd.s32 %s12, 1
    %s20 = ssub.s32 %s12, %s19
    %p21 = scmp.eq.s32.totalorder %s20, 0
    %s23 = sadd.s32 %s22, 1
    %s24 = scalar_select %p21, %s22, %s23
    %p27 = pneg %p21
    %p28 = scmp.eq.s32.totalorder %s12, 1
    %p29 = por %p27, %p28
    %p30 = scmp.ne.s32.totalorder %s22, %s25
    %p31 = scmp.eq.s32.totalorder %s12, 0
    %p32 = por %p30, %p31
    %p33 = scmp.ne.s32.totalorder %s22, %s25
    %p34 = scmp.eq.s32.totalorder %s17, 1
    %p35 = por %p33, %p34
    %p36 = scmp.ne.s32.totalorder %s25, %s26
    %p37 = scmp.eq.s32.totalorder %s17, 0
    %p38 = por %p36, %p37
    %p39 = scmp.ne.s32.totalorder %s25, %s26
    %p40 = scmp.eq.s32.totalorder %s18, 1
    %p41 = por %p39, %p40
    %p43 = scmp.ne.s32.totalorder %s26, %s42
    %p44 = scmp.eq.s32.totalorder %s18, 0
    %p45 = por %p43, %p44
    %s47 = sadd.s32 %s46, 1
    %p50 = scmp.eq.s32.totalorder %s12, 1
    %p51 = scmp.ne.s32.totalorder %s46, %s48
    %p52 = scmp.eq.s32.totalorder %s12, 0
    %p53 = por %p51, %p52
    %p54 = scmp.ne.s32.totalorder %s46, %s48
    %p55 = scmp.eq.s32.totalorder %s17, 1
    %p56 = por %p54, %p55
    %p57 = scmp.ne.s32.totalorder %s48, %s49
    %p58 = scmp.eq.s32.totalorder %s17, 0
    %p59 = por %p57, %p58
    %p60 = scmp.ne.s32.totalorder %s48, %s49
    %p61 = scmp.eq.s32.totalorder %s18, 1
    %p62 = por %p60, %p61
    %p64 = scmp.ne.s32.totalorder %s49, %s63
    %p65 = scmp.eq.s32.totalorder %s18, 0
    %p66 = por %p64, %p65
    %s68 = sadd.s32 %s67, 1
    %p71 = scmp.eq.s32.totalorder %s12, 1
    %p72 = scmp.ne.s32.totalorder %s67, %s69
    %p73 = scmp.eq.s32.totalorder %s12, 0
    %p74 = por %p72, %p73
    %p75 = scmp.ne.s32.totalorder %s67, %s69
    %p76 = scmp.eq.s32.totalorder %s17, 1
    %p77 = por %p75, %p76
    %p78 = scmp.ne.s32.totalorder %s69, %s70
    %p79 = scmp.eq.s32.totalorder %s17, 0
    %p80 = por %p78, %p79
    %p81 = scmp.ne.s32.totalorder %s69, %s70
    %p82 = scmp.eq.s32.totalorder %s18, 1
    %p83 = por %p81, %p82
    %p85 = scmp.ne.s32.totalorder %s70, %s84
    %p86 = scmp.eq.s32.totalorder %s18, 0
    %p87 = por %p85, %p86
    %s88 = ssub.s32 %s12, %s19
    %p89 = scmp.eq.s32.totalorder %s88, 0
    %s91 = sadd.s32 %s90, 1
    %s92 = scalar_select %p89, %s90, %s91
    %p95 = pneg %p89
    %p96 = scmp.eq.s32.totalorder %s12, 1
    %p97 = por %p95, %p96
    %p98 = scmp.ne.s32.totalorder %s90, %s93
    %p99 = scmp.eq.s32.totalorder %s12, 0
    %p100 = por %p98, %p99
    %p101 = scmp.ne.s32.totalorder %s90, %s93
    %p102 = scmp.eq.s32.totalorder %s17, 1
    %p103 = por %p101, %p102
    %p104 = scmp.ne.s32.totalorder %s93, %s94
    %p105 = scmp.eq.s32.totalorder %s17, 0
    %p106 = por %p104, %p105
    %p107 = scmp.ne.s32.totalorder %s93, %s94
    %p108 = scmp.eq.s32.totalorder %s18, 1
    %p109 = por %p107, %p108
    %p111 = scmp.ne.s32.totalorder %s94, %s110
    %p112 = scmp.eq.s32.totalorder %s18, 0
    %p113 = por %p111, %p112
    %s115 = sadd.s32 %s114, 1
    %p118 = scmp.eq.s32.totalorder %s12, 1
    %p119 = scmp.ne.s32.totalorder %s114, %s116
    %p120 = scmp.eq.s32.totalorder %s12, 0
    %p121 = por %p119, %p120
    %p122 = scmp.ne.s32.totalorder %s114, %s116
    %p123 = scmp.eq.s32.totalorder %s17, 1
    %p124 = por %p122, %p123
    %p125 = scmp.ne.s32.totalorder %s116, %s117
    %p126 = scmp.eq.s32.totalorder %s17, 0
    %p127 = por %p125, %p126
    %p128 = scmp.ne.s32.totalorder %s116, %s117
    %p129 = scmp.eq.s32.totalorder %s18, 1
    %p130 = por %p128, %p129
    %p132 = scmp.ne.s32.totalorder %s117, %s131
    %p133 = scmp.eq.s32.totalorder %s18, 0
    %p134 = por %p132, %p133
    %s136 = sadd.s32 %s135, 1
    %p139 = scmp.eq.s32.totalorder %s12, 1
    %p140 = scmp.ne.s32.totalorder %s135, %s137
    %p141 = scmp.eq.s32.totalorder %s12, 0
    %p142 = por %p140, %p141
    %p143 = scmp.ne.s32.totalorder %s135, %s137
    %p144 = scmp.eq.s32.totalorder %s17, 1
    %p145 = por %p143, %p144
    %p146 = scmp.ne.s32.totalorder %s137, %s138
    %p147 = scmp.eq.s32.totalorder %s17, 0
    %p148 = por %p146, %p147
    %p149 = scmp.ne.s32.totalorder %s137, %s138
    %p150 = scmp.eq.s32.totalorder %s18, 1
    %p151 = por %p149, %p150
    %p153 = scmp.ne.s32.totalorder %s138, %s152
    %p154 = scmp.eq.s32.totalorder %s18, 0
    %p155 = por %p153, %p154
    %s156 = ssub.s32 %s12, %s19
    %p157 = scmp.eq.s32.totalorder %s156, 0
    %s159 = sadd.s32 %s158, 1
    %s160 = scalar_select %p157, %s158, %s159
    %p163 = pneg %p157
    %p164 = scmp.eq.s32.totalorder %s12, 1
    %p165 = por %p163, %p164
    %p166 = scmp.ne.s32.totalorder %s158, %s161
    %p167 = scmp.eq.s32.totalorder %s12, 0
    %p168 = por %p166, %p167
    %p169 = scmp.ne.s32.totalorder %s158, %s161
    %p170 = scmp.eq.s32.totalorder %s17, 1
    %p171 = por %p169, %p170
    %p172 = scmp.ne.s32.totalorder %s161, %s162
    %p173 = scmp.eq.s32.totalorder %s17, 0
    %p174 = por %p172, %p173
    %p175 = scmp.ne.s32.totalorder %s161, %s162
    %p176 = scmp.eq.s32.totalorder %s18, 1
    %p177 = por %p175, %p176
    %p179 = scmp.ne.s32.totalorder %s162, %s178
    %p180 = scmp.eq.s32.totalorder %s18, 0
    %p181 = por %p179, %p180
    %p182 = scmp.le.s32.totalorder 1, %s12
    %p183 = scmp.lt.s32.totalorder %s12, 3
    %p184 = pnand %p182, %p183
    %p185 = pneg %p184
    // Predicated region
    $region9: #{convlstm_cell_nchw.1} parent=5 // pred_check
      _
    $region10: #{convlstm_cell_nchw.1} parent=5 // pred_check_branch
      %187 = sbr.rel (%p184) target = $region12
    $region11: #{convlstm_cell_nchw.1} parent=5 // pred_region
      %s188 = ssub.s32 %s12, 1
      // Predicated region
      $region13: #{convlstm_cell_nchw.1} parent=11 // pred_check
        %p189 = pneg %p59
      $region14: #{convlstm_cell_nchw.1} parent=11 // pred_check_branch
        %191 = sbr.rel (%p189) target = $region16
      $region15: #{convlstm_cell_nchw.1} parent=11 // pred_region
        _
      $region16: #{convlstm_cell_nchw.1} parent=11 // pred_fallthru
        _
      // Predicated region
      $region17: #{convlstm_cell_nchw.1} parent=11 // pred_check
        %p192 = pneg %p80
      $region18: #{convlstm_cell_nchw.1} parent=11 // pred_check_branch
        %194 = sbr.rel (%p192) target = $region20
      $region19: #{convlstm_cell_nchw.1} parent=11 // pred_region
        _
      $region20: #{convlstm_cell_nchw.1} parent=11 // pred_fallthru
        _
      // Predicated region
      $region21: #{convlstm_cell_nchw.1} parent=11 // pred_check
        %p195 = pneg %p127
      $region22: #{convlstm_cell_nchw.1} parent=11 // pred_check_branch
        %197 = sbr.rel (%p195) target = $region24
      $region23: #{convlstm_cell_nchw.1} parent=11 // pred_region
        _
      $region24: #{convlstm_cell_nchw.1} parent=11 // pred_fallthru
        _
      // Predicated region
      $region25: #{convlstm_cell_nchw.1} parent=11 // pred_check
        %p198 = pneg %p148
      $region26: #{convlstm_cell_nchw.1} parent=11 // pred_check_branch
        %200 = sbr.rel (%p198) target = $region28
      $region27: #{convlstm_cell_nchw.1} parent=11 // pred_region
        _
      $region28: #{convlstm_cell_nchw.1} parent=11 // pred_fallthru
        _
    $region12: #{convlstm_cell_nchw.1} parent=5 // pred_fallthru
      _
    %p201 = scmp.lt.s32.totalorder %s12, 2
    // Predicated region
    $region29: #{convlstm_cell_nchw.1} parent=5 // pred_check
      %p202 = pneg %p201
    $region30: #{convlstm_cell_nchw.1} parent=5 // pred_check_branch
      %204 = sbr.rel (%p202) target = $region32
    $region31: #{convlstm_cell_nchw.1} parent=5 // pred_region
      // Predicated region
      $region33: #{convlstm_cell_nchw.1} parent=31 // pred_check
        %p205 = pneg %p32
      $region34: #{convlstm_cell_nchw.1} parent=31 // pred_check_branch
        %207 = sbr.rel (%p205) target = $region36
      $region35: #{convlstm_cell_nchw.1} parent=31 // pred_region
        %s208 = smul.u32 32, %s12
        %p209 = scmp.lt.s32.totalorder %s208, 63
        %s210 = scalar_select %p209, %s208, 63
        %s211 = smul.addr %s210, 3
        %s212 = smul.addr %s211, 4
        %s213 = scalar_lea.vmem %s0, %s212
        %s214 = smul.u32 32, %s12
      $region36: #{convlstm_cell_nchw.1} parent=31 // pred_fallthru
        _
      // Predicated region
      $region37: #{convlstm_cell_nchw.1} parent=31 // pred_check
        %p215 = pneg %p100
      $region38: #{convlstm_cell_nchw.1} parent=31 // pred_check_branch
        %217 = sbr.rel (%p215) target = $region40
      $region39: #{convlstm_cell_nchw.1} parent=31 // pred_region
        %s218 = smul.u32 32, %s12
        %p219 = scmp.lt.s32.totalorder %s218, 63
        %s220 = scalar_select %p219, %s218, 63
        %s221 = smul.addr %s220, 8
        %s222 = scalar_lea.vmem %s3, %s221
        %s223 = smul.u32 32, %s12
      $region40: #{convlstm_cell_nchw.1} parent=31 // pred_fallthru
        _
    $region32: #{convlstm_cell_nchw.1} parent=5 // pred_fallthru
      _
    %p224 = scmp.le.s32.totalorder 1, %s12
    %p225 = scmp.lt.s32.totalorder %s12, 3
    %p226 = pnand %p224, %p225
    %p227 = pneg %p226
    // Predicated region
    $region41: #{convlstm_cell_nchw.1} parent=5 // pred_check
      _
    $region42: #{convlstm_cell_nchw.1} parent=5 // pred_check_branch
      %229 = sbr.rel (%p226) target = $region44
    $region43: #{convlstm_cell_nchw.1} parent=5 // pred_region
      %s230 = ssub.s32 %s12, 1
      %s231 = smul.u32 32, %s17
      %p232 = scmp.lt.s32.totalorder %s231, 63
      %s233 = scalar_select %p232, %s231, 63
      %s234 = smul.addr %s233, 3
      %s235 = smul.addr %s234, 4
      %s236 = scalar_lea.vmem %s0, %s235
      %p237 = pneg %p38
      %p238 = pneg %p35
      %p239 = pneg %p59
      %p240 = pneg %p56
      %p241 = pneg %p80
      %p242 = pneg %p77
      %s243 = smul.u32 32, %s17
      %p244 = scmp.lt.s32.totalorder %s243, 63
      %s245 = scalar_select %p244, %s243, 63
      %s246 = smul.addr %s245, 8
      %s247 = scalar_lea.vmem %s3, %s246
      %p248 = pneg %p106
      %p249 = pneg %p103
      %p250 = pneg %p127
      %p251 = pneg %p124
      %p252 = pneg %p148
      %p253 = pneg %p145
      %p254 = pneg %p174
      %p255 = pneg %p171
      %s256 = smul.u32 32, %s17
      %p257 = scmp.lt.s32.totalorder %s256, 63
      %s258 = scalar_select %p257, %s256, 63
      %s259 = smul.addr %s258, 8
      %s260 = scalar_lea.vmem %s6, %s259
      %s261 = smul.u32 32, %s17
      %p262 = scmp.lt.s32.totalorder %s261, 63
      %s263 = scalar_select %p262, %s261, 63
      %s264 = smul.addr %s263, 3
      %s265 = smul.addr %s264, 4
      %s266 = scalar_lea.vmem %s0, %s265
      %s267 = smul.u32 32, %s17
      %s268 = smul.u32 32, %s17
      %p269 = scmp.lt.s32.totalorder %s268, 63
      %s270 = scalar_select %p269, %s268, 63
      %s271 = smul.addr %s270, 8
      %s272 = scalar_lea.vmem %s3, %s271
      %s273 = smul.u32 32, %s17
      %s274 = smul.u32 32, %s17
      %p275 = scmp.lt.s32.totalorder %s274, 63
      %s276 = scalar_select %p275, %s274, 63
      %s277 = smul.addr %s276, 8
      %s278 = scalar_lea.vmem %s6, %s277
      %s279 = smul.u32 32, %s17
      %v281 = vld [vmem:[%s266] sm:$0xff]
      %v282 = vld [vmem:[%s266 + $0x8] sm:$0xf]
      %v283 = vld [vmem:[%s266 + $0xc] sm:$0xff]
      %v284 = vld [vmem:[%s266 + $0x14] sm:$0xf]
      %v285 = vld [vmem:[%s266 + $0x18] sm:$0xff]
      %v286 = vld [vmem:[%s266 + $0x20] sm:$0xf]
      %v287 = vld [vmem:[%s266 + $0x24] sm:$0xff]
      %v288 = vld [vmem:[%s266 + $0x2c] sm:$0xf]
      %v289 = vld [vmem:[%s266 + $0x30] sm:$0xff]
      %v290 = vld [vmem:[%s266 + $0x38] sm:$0xf]
      %v291 = vld [vmem:[%s266 + $0x3c] sm:$0xff]
      %v292 = vld [vmem:[%s266 + $0x44] sm:$0xf]
      %v293 = vld [vmem:[%s266 + $0x48] sm:$0xff]
      %v294 = vld [vmem:[%s266 + $0x50] sm:$0xf]
      %v295 = vld [vmem:[%s266 + $0x54] sm:$0xff]
      %v296 = vld [vmem:[%s266 + $0x5c] sm:$0xf]
      %v297 = vld [vmem:[%s266 + $0x60] sm:$0xff]
      %v298 = vld [vmem:[%s266 + $0x68] sm:$0xf]
      %v299 = vld [vmem:[%s266 + $0x6c] sm:$0xff]
      %v300 = vld [vmem:[%s266 + $0x74] sm:$0xf]
      %v301 = vld [vmem:[%s266 + $0x78] sm:$0xff]
      %v302 = vld [vmem:[%s266 + $0x80] sm:$0xf]
      %v303 = vld [vmem:[%s266 + $0x84] sm:$0xff]
      %v304 = vld [vmem:[%s266 + $0x8c] sm:$0xf]
      %v305 = vld [vmem:[%s266 + $0x90] sm:$0xff]
      %v306 = vld [vmem:[%s266 + $0x98] sm:$0xf]
      %v307 = vld [vmem:[%s266 + $0x9c] sm:$0xff]
      %v308 = vld [vmem:[%s266 + $0xa4] sm:$0xf]
      %v309 = vld [vmem:[%s266 + $0xa8] sm:$0xff]
      %v310 = vld [vmem:[%s266 + $0xb0] sm:$0xf]
      %v311 = vld [vmem:[%s266 + $0xb4] sm:$0xff]
      %v312 = vld [vmem:[%s266 + $0xbc] sm:$0xf]
      %v313 = vld [vmem:[%s266 + $0xc0] sm:$0xff]
      %v314 = vld [vmem:[%s266 + $0xc8] sm:$0xf]
      %v315 = vld [vmem:[%s266 + $0xcc] sm:$0xff]
      %v316 = vld [vmem:[%s266 + $0xd4] sm:$0xf]
      %v317 = vld [vmem:[%s266 + $0xd8] sm:$0xff]
      %v318 = vld [vmem:[%s266 + $0xe0] sm:$0xf]
      %v319 = vld [vmem:[%s266 + $0xe4] sm:$0xff]
      %v320 = vld [vmem:[%s266 + $0xec] sm:$0xf]
      %v321 = vld [vmem:[%s266 + $0xf0] sm:$0xff]
      %v322 = vld [vmem:[%s266 + $0xf8] sm:$0xf]
      %v323 = vld [vmem:[%s266 + $0xfc] sm:$0xff]
      %v324 = vld [vmem:[%s266 + $0x104] sm:$0xf]
      %v325 = vld [vmem:[%s266 + $0x108] sm:$0xff]
      %v326 = vld [vmem:[%s266 + $0x110] sm:$0xf]
      %v327 = vld [vmem:[%s266 + $0x114] sm:$0xff]
      %v328 = vld [vmem:[%s266 + $0x11c] sm:$0xf]
      %v329 = vld [vmem:[%s266 + $0x120] sm:$0xff]
      %v330 = vld [vmem:[%s266 + $0x128] sm:$0xf]
      %v331 = vld [vmem:[%s266 + $0x12c] sm:$0xff]
      %v332 = vld [vmem:[%s266 + $0x134] sm:$0xf]
      %v333 = vld [vmem:[%s266 + $0x138] sm:$0xff]
      %v334 = vld [vmem:[%s266 + $0x140] sm:$0xf]
      %v335 = vld [vmem:[%s266 + $0x144] sm:$0xff]
      %v336 = vld [vmem:[%s266 + $0x14c] sm:$0xf]
      %v337 = vld [vmem:[%s266 + $0x150] sm:$0xff]
      %v338 = vld [vmem:[%s266 + $0x158] sm:$0xf]
      %v339 = vld [vmem:[%s266 + $0x15c] sm:$0xff]
      %v340 = vld [vmem:[%s266 + $0x164] sm:$0xf]
      %v341 = vld [vmem:[%s266 + $0x168] sm:$0xff]
      %v342 = vld [vmem:[%s266 + $0x170] sm:$0xf]
      %v343 = vld [vmem:[%s266 + $0x174] sm:$0xff]
      %v344 = vld [vmem:[%s266 + $0x17c] sm:$0xf]
      %v345 = vld [vmem:[%s1] sm:$0xf]
      %v346 = vld [vmem:[%s1 + $0x4] sm:$0xf]
      %v347 = vld [vmem:[%s1 + $0x8] sm:$0xf]
      %v348 = vld [vmem:[%s1 + $0xc] sm:$0xf]
      %v349 = vld [vmem:[%s1 + $0x10] sm:$0xf]
      %v350 = vld [vmem:[%s1 + $0x14] sm:$0xf]
      %v351 = vld [vmem:[%s1 + $0x18] sm:$0xf]
      %v352 = vld [vmem:[%s1 + $0x1c] sm:$0xf]
      %v353 = vld [vmem:[%s1 + $0x20] sm:$0xf]
      %v354 = vld [vmem:[%s1 + $0x24] sm:$0xf]
      %v355 = vld [vmem:[%s1 + $0x28] sm:$0xf]
      %v356 = vld [vmem:[%s1 + $0x2c] sm:$0xf]
      %v357 = vld [vmem:[%s1 + $0x30] sm:$0xf]
      %v358 = vld [vmem:[%s1 + $0x34] sm:$0xf]
      %v359 = vld [vmem:[%s1 + $0x38] sm:$0xf]
      %v360 = vld [vmem:[%s1 + $0x3c] sm:$0xf]
      %v361 = vld [vmem:[%s1 + $0x40] sm:$0xf]
      %v362 = vld [vmem:[%s1 + $0x44] sm:$0xf]
      %v363 = vld [vmem:[%s1 + $0x48] sm:$0xf]
      %v364 = vld [vmem:[%s1 + $0x4c] sm:$0xf]
      %v365 = vld [vmem:[%s1 + $0x50] sm:$0xf]
      %v366 = vld [vmem:[%s1 + $0x54] sm:$0xf]
      %v367 = vld [vmem:[%s1 + $0x58] sm:$0xf]
      %v368 = vld [vmem:[%s1 + $0x5c] sm:$0xf]
      %v369 = vld [vmem:[%s1 + $0x60] sm:$0xf]
      %v370 = vld [vmem:[%s1 + $0x64] sm:$0xf]
      %v371 = vld [vmem:[%s1 + $0x68] sm:$0xf]
      %v372 = vld [vmem:[%s1 + $0x6c] sm:$0xf]
      %v373 = vld [vmem:[%s1 + $0x70] sm:$0xf]
      %v374 = vld [vmem:[%s1 + $0x74] sm:$0xf]
      %v375 = vld [vmem:[%s1 + $0x78] sm:$0xf]
      %v376 = vld [vmem:[%s1 + $0x7c] sm:$0xf]
      %v377 = vld [vmem:[%s1 + $0x80] sm:$0xf]
      %v378 = vld [vmem:[%s1 + $0x84] sm:$0xf]
      %v379 = vld [vmem:[%s1 + $0x88] sm:$0xf]
      %v380 = vld [vmem:[%s1 + $0x8c] sm:$0xf]
      %v381 = vld [vmem:[%s1 + $0x90] sm:$0xf]
      %v382 = vld [vmem:[%s1 + $0x94] sm:$0xf]
      %v383 = vld [vmem:[%s1 + $0x98] sm:$0xf]
      %v384 = vld [vmem:[%s1 + $0x9c] sm:$0xf]
      %v385 = vld [vmem:[%s1 + $0xa0] sm:$0xf]
      %v386 = vld [vmem:[%s1 + $0xa4] sm:$0xf]
      %v387 = vld [vmem:[%s1 + $0xa8] sm:$0xf]
      %v388 = vld [vmem:[%s1 + $0xac] sm:$0xf]
      %v389 = vld [vmem:[%s1 + $0xb0] sm:$0xf]
      %v390 = vld [vmem:[%s1 + $0xb4] sm:$0xf]
      %v391 = vld [vmem:[%s1 + $0xb8] sm:$0xf]
      %v392 = vld [vmem:[%s1 + $0xbc] sm:$0xf]
      %v393 = vld [vmem:[%s2] sm:$0x1]
      %v395 = vlaneseq
      %v396 = vshrl.u32 %v395, 7
      %v397 = vsub.s32 0, %v396
      %v398 = vrot.slane %v393, %v397
      %v464 = vunpack.c.l.b16 %v281
      %v465 = vunpack.c.h.b16 %v281
      %v466 = vunpack.c.l.b16 %v282
      %v467 = vunpack.c.l.b16 %v283
      %v468 = vunpack.c.h.b16 %v283
      %v469 = vunpack.c.l.b16 %v284
      %v470 = vunpack.c.l.b16 %v285
      %v471 = vunpack.c.h.b16 %v285
      %v472 = vunpack.c.l.b16 %v286
      %v473 = vunpack.c.l.b16 %v287
      %v474 = vunpack.c.h.b16 %v287
      %v475 = vunpack.c.l.b16 %v288
      %v476 = vunpack.c.l.b16 %v289
      %v477 = vunpack.c.h.b16 %v289
      %v478 = vunpack.c.l.b16 %v290
      %v479 = vunpack.c.l.b16 %v291
      %v480 = vunpack.c.h.b16 %v291
      %v481 = vunpack.c.l.b16 %v292
      %v482 = vunpack.c.l.b16 %v293
      %v483 = vunpack.c.h.b16 %v293
      %v484 = vunpack.c.l.b16 %v294
      %v485 = vunpack.c.l.b16 %v295
      %v486 = vunpack.c.h.b16 %v295
      %v487 = vunpack.c.l.b16 %v296
      %v488 = vunpack.c.l.b16 %v297
      %v489 = vunpack.c.h.b16 %v297
      %v490 = vunpack.c.l.b16 %v298
      %v491 = vunpack.c.l.b16 %v299
      %v492 = vunpack.c.h.b16 %v299
      %v493 = vunpack.c.l.b16 %v300
      %v494 = vunpack.c.l.b16 %v301
      %v495 = vunpack.c.h.b16 %v301
      %v496 = vunpack.c.l.b16 %v302
      %v497 = vunpack.c.l.b16 %v303
      %v498 = vunpack.c.h.b16 %v303
      %v499 = vunpack.c.l.b16 %v304
      %v500 = vunpack.c.l.b16 %v305
      %v501 = vunpack.c.h.b16 %v305
      %v502 = vunpack.c.l.b16 %v306
      %v503 = vunpack.c.l.b16 %v307
      %v504 = vunpack.c.h.b16 %v307
      %v505 = vunpack.c.l.b16 %v308
      %v506 = vunpack.c.l.b16 %v309
      %v507 = vunpack.c.h.b16 %v309
      %v508 = vunpack.c.l.b16 %v310
      %v509 = vunpack.c.l.b16 %v311
      %v510 = vunpack.c.h.b16 %v311
      %v511 = vunpack.c.l.b16 %v312
      %v512 = vunpack.c.l.b16 %v313
      %v513 = vunpack.c.h.b16 %v313
      %v514 = vunpack.c.l.b16 %v314
      %v515 = vunpack.c.l.b16 %v315
      %v516 = vunpack.c.h.b16 %v315
      %v517 = vunpack.c.l.b16 %v316
      %v518 = vunpack.c.l.b16 %v317
      %v519 = vunpack.c.h.b16 %v317
      %v520 = vunpack.c.l.b16 %v318
      %v521 = vunpack.c.l.b16 %v319
      %v522 = vunpack.c.h.b16 %v319
      %v523 = vunpack.c.l.b16 %v320
      %v524 = vunpack.c.l.b16 %v321
      %v525 = vunpack.c.h.b16 %v321
      %v526 = vunpack.c.l.b16 %v322
      %v527 = vunpack.c.l.b16 %v323
      %v528 = vunpack.c.h.b16 %v323
      %v529 = vunpack.c.l.b16 %v324
      %v530 = vunpack.c.l.b16 %v325
      %v531 = vunpack.c.h.b16 %v325
      %v532 = vunpack.c.l.b16 %v326
      %v533 = vunpack.c.l.b16 %v327
      %v534 = vunpack.c.h.b16 %v327
      %v535 = vunpack.c.l.b16 %v328
      %v536 = vunpack.c.l.b16 %v329
      %v537 = vunpack.c.h.b16 %v329
      %v538 = vunpack.c.l.b16 %v330
      %v539 = vunpack.c.l.b16 %v331
      %v540 = vunpack.c.h.b16 %v331
      %v541 = vunpack.c.l.b16 %v332
      %v542 = vunpack.c.l.b16 %v333
      %v543 = vunpack.c.h.b16 %v333
      %v544 = vunpack.c.l.b16 %v334
      %v545 = vunpack.c.l.b16 %v335
      %v546 = vunpack.c.h.b16 %v335
      %v547 = vunpack.c.l.b16 %v336
      %v548 = vunpack.c.l.b16 %v337
      %v549 = vunpack.c.h.b16 %v337
      %v550 = vunpack.c.l.b16 %v338
      %v551 = vunpack.c.l.b16 %v339
      %v552 = vunpack.c.h.b16 %v339
      %v553 = vunpack.c.l.b16 %v340
      %v554 = vunpack.c.l.b16 %v341
      %v555 = vunpack.c.h.b16 %v341
      %v556 = vunpack.c.l.b16 %v342
      %v557 = vunpack.c.l.b16 %v343
      %v558 = vunpack.c.h.b16 %v343
      %v559 = vunpack.c.l.b16 %v344
      %v560 = vpack.c.b16 %v467, %v464
      %v561 = vpack.c.b16 %v468, %v465
      %v562 = vpack.c.b16 %v469, %v466
      %v563 = vpack.c.b16 %v473, %v470
      %v564 = vpack.c.b16 %v474, %v471
      %v565 = vpack.c.b16 %v475, %v472
      %v566 = vpack.c.b16 %v479, %v476
      %v567 = vpack.c.b16 %v480, %v477
      %v568 = vpack.c.b16 %v481, %v478
      %v569 = vpack.c.b16 %v485, %v482
      %v570 = vpack.c.b16 %v486, %v483
      %v571 = vpack.c.b16 %v487, %v484
      %v572 = vpack.c.b16 %v491, %v488
      %v573 = vpack.c.b16 %v492, %v489
      %v574 = vpack.c.b16 %v493, %v490
      %v575 = vpack.c.b16 %v497, %v494
      %v576 = vpack.c.b16 %v498, %v495
      %v577 = vpack.c.b16 %v499, %v496
      %v578 = vpack.c.b16 %v503, %v500
      %v579 = vpack.c.b16 %v504, %v501
      %v580 = vpack.c.b16 %v505, %v502
      %v581 = vpack.c.b16 %v509, %v506
      %v582 = vpack.c.b16 %v510, %v507
      %v583 = vpack.c.b16 %v511, %v508
      %v584 = vpack.c.b16 %v515, %v512
      %v585 = vpack.c.b16 %v516, %v513
      %v586 = vpack.c.b16 %v517, %v514
      %v587 = vpack.c.b16 %v521, %v518
      %v588 = vpack.c.b16 %v522, %v519
      %v589 = vpack.c.b16 %v523, %v520
      %v590 = vpack.c.b16 %v527, %v524
      %v591 = vpack.c.b16 %v528, %v525
      %v592 = vpack.c.b16 %v529, %v526
      %v593 = vpack.c.b16 %v533, %v530
      %v594 = vpack.c.b16 %v534, %v531
      %v595 = vpack.c.b16 %v535, %v532
      %v596 = vpack.c.b16 %v539, %v536
      %v597 = vpack.c.b16 %v540, %v537
      %v598 = vpack.c.b16 %v541, %v538
      %v599 = vpack.c.b16 %v545, %v542
      %v600 = vpack.c.b16 %v546, %v543
      %v601 = vpack.c.b16 %v547, %v544
      %v602 = vpack.c.b16 %v551, %v548
      %v603 = vpack.c.b16 %v552, %v549
      %v604 = vpack.c.b16 %v553, %v550
      %v605 = vpack.c.b16 %v557, %v554
      %v606 = vpack.c.b16 %v558, %v555
      %v607 = vpack.c.b16 %v559, %v556
      %v704 = vunpack.c.l.b16 %v345
      %v705 = vunpack.c.l.b16 %v346
      %v706 = vunpack.c.l.b16 %v347
      %v707 = vunpack.c.l.b16 %v348
      %v708 = vunpack.c.l.b16 %v349
      %v709 = vunpack.c.l.b16 %v350
      %v710 = vunpack.c.l.b16 %v351
      %v711 = vunpack.c.l.b16 %v352
      %v712 = vunpack.c.l.b16 %v353
      %v713 = vunpack.c.l.b16 %v354
      %v714 = vunpack.c.l.b16 %v355
      %v715 = vunpack.c.l.b16 %v356
      %v716 = vunpack.c.l.b16 %v357
      %v717 = vunpack.c.l.b16 %v358
      %v718 = vunpack.c.l.b16 %v359
      %v719 = vunpack.c.l.b16 %v360
      %v720 = vunpack.c.l.b16 %v361
      %v721 = vunpack.c.l.b16 %v362
      %v722 = vunpack.c.l.b16 %v363
      %v723 = vunpack.c.l.b16 %v364
      %v724 = vunpack.c.l.b16 %v365
      %v725 = vunpack.c.l.b16 %v366
      %v726 = vunpack.c.l.b16 %v367
      %v727 = vunpack.c.l.b16 %v368
      %v728 = vunpack.c.l.b16 %v369
      %v729 = vunpack.c.l.b16 %v370
      %v730 = vunpack.c.l.b16 %v371
      %v731 = vunpack.c.l.b16 %v372
      %v732 = vunpack.c.l.b16 %v373
      %v733 = vunpack.c.l.b16 %v374
      %v734 = vunpack.c.l.b16 %v375
      %v735 = vunpack.c.l.b16 %v376
      %v736 = vunpack.c.l.b16 %v377
      %v737 = vunpack.c.l.b16 %v378
      %v738 = vunpack.c.l.b16 %v379
      %v739 = vunpack.c.l.b16 %v380
      %v740 = vunpack.c.l.b16 %v381
      %v741 = vunpack.c.l.b16 %v382
      %v742 = vunpack.c.l.b16 %v383
      %v743 = vunpack.c.l.b16 %v384
      %v744 = vunpack.c.l.b16 %v385
      %v745 = vunpack.c.l.b16 %v386
      %v746 = vunpack.c.l.b16 %v387
      %v747 = vunpack.c.l.b16 %v388
      %v748 = vunpack.c.l.b16 %v389
      %v749 = vunpack.c.l.b16 %v390
      %v750 = vunpack.c.l.b16 %v391
      %v751 = vunpack.c.l.b16 %v392
      %v752 = vpack.c.b16 %v705, %v704
      %v753 = vpack.c.b16 %v707, %v706
      %v754 = vpack.c.b16 %v709, %v708
      %v755 = vpack.c.b16 %v711, %v710
      %v756 = vpack.c.b16 %v713, %v712
      %v757 = vpack.c.b16 %v715, %v714
      %v758 = vpack.c.b16 %v717, %v716
      %v759 = vpack.c.b16 %v719, %v718
      %v760 = vpack.c.b16 %v721, %v720
      %v761 = vpack.c.b16 %v723, %v722
      %v762 = vpack.c.b16 %v725, %v724
      %v763 = vpack.c.b16 %v727, %v726
      %v764 = vpack.c.b16 %v729, %v728
      %v765 = vpack.c.b16 %v731, %v730
      %v766 = vpack.c.b16 %v733, %v732
      %v767 = vpack.c.b16 %v735, %v734
      %v768 = vpack.c.b16 %v737, %v736
      %v769 = vpack.c.b16 %v739, %v738
      %v770 = vpack.c.b16 %v741, %v740
      %v771 = vpack.c.b16 %v743, %v742
      %v772 = vpack.c.b16 %v745, %v744
      %v773 = vpack.c.b16 %v747, %v746
      %v774 = vpack.c.b16 %v749, %v748
      %v775 = vpack.c.b16 %v751, %v750
      %800 = vmatprep.subr.bf16.mxu0 0
      %801 = vmatpush1.bf16.msra.mxu0 %v752
      %802 = vmatprep.subr.bf16.mxu0 0
      %803 = vmatpush1.bf16.msra.mxu0 %v753
      %804 = vmatprep.subr.bf16.mxu0 0
      %805 = vmatpush1.bf16.msra.mxu0 %v754
      %806 = vmatprep.subr.bf16.mxu0 0
      %807 = vmatpush1.bf16.msra.mxu0 %v755
      %808 = vmatprep.subr.bf16.mxu0 0
      %809 = vmatpush1.bf16.msra.mxu0 %v756
      %810 = vmatprep.subr.bf16.mxu0 0
      %811 = vmatpush1.bf16.msra.mxu0 %v757
      %812 = vmatprep.subr.bf16.mxu0 0
      %813 = vmatpush1.bf16.msra.mxu0 %v758
      %814 = vmatprep.subr.bf16.mxu0 0
      %815 = vmatpush1.bf16.msra.mxu0 %v759
      %816 = vmatprep.subr.bf16.mxu0 0
      %817 = vmatpush1.bf16.msra.mxu0 %v760
      %818 = vmatprep.subr.bf16.mxu0 0
      %819 = vmatpush1.bf16.msra.mxu0 %v761
      %820 = vmatprep.subr.bf16.mxu0 0
      %821 = vmatpush1.bf16.msra.mxu0 %v762
      %822 = vmatprep.subr.bf16.mxu0 0
      %823 = vmatpush1.bf16.msra.mxu0 %v763
      %824 = vmatprep.subr.bf16.mxu0 0
      %825 = vmatpush1.bf16.msra.mxu0 %v764
      %826 = vmatprep.subr.bf16.mxu0 0
      %827 = vmatpush1.bf16.msra.mxu0 %v765
      %828 = vmatprep.subr.bf16.mxu0 0
      %829 = vmatpush1.bf16.msra.mxu0 %v766
      %830 = vmatprep.subr.bf16.mxu0 0
      %831 = vmatpush1.bf16.msra.mxu0 %v767
      %832 = vmatprep.mubr.bf16.mxu0 %v561
      %833 = vmatmul.mubr.bf16.gmra.mrb[0].mxu0 %v560
      %v834 = vpop.f32.mrb[0].mxu0
      %v835 = vadd.f32 %v398, %v834
      %v836 = vpop.f32.mrb[0].mxu0
      %v837 = vpop.f32.mrb[0].mxu0
      %v838 = vadd.f32 %v398, %v837
      %v839 = vpop.f32.mrb[0].mxu0
      %840 = vmatprep.mubr.bf16.mxu0 %v564
      %841 = vmatmul.mubr.bf16.gmra.mrb[0].mxu0 %v563
      %v842 = vpop.f32.mrb[0].mxu0
      %v843 = vadd.f32 %v398, %v842
      %v844 = vpop.f32.mrb[0].mxu0
      %v845 = vpop.f32.mrb[0].mxu0
      %v846 = vadd.f32 %v398, %v845
      %v847 = vpop.f32.mrb[0].mxu0
      %848 = vmatprep.mubr.bf16.mxu0 %v567
      %849 = vmatmul.mubr.bf16.gmra.mrb[0].mxu0 %v566
      %v850 = vpop.f32.mrb[0].mxu0
      %v851 = vadd.f32 %v398, %v850
      %v852 = vpop.f32.mrb[0].mxu0
      %v853 = vpop.f32.mrb[0].mxu0
      %v854 = vadd.f32 %v398, %v853
      %v855 = vpop.f32.mrb[0].mxu0
      %856 = vmatprep.mubr.bf16.mxu0 %v570
      %857 = vmatmul.mubr.bf16.gmra.mrb[0].mxu0 %v569
      %v858 = vpop.f32.mrb[0].mxu0
      %v859 = vadd.f32 %v398, %v858
      %v860 = vpop.f32.mrb[0].mxu0
      %v861 = vpop.f32.mrb[0].mxu0
      %v862 = vadd.f32 %v398, %v861
      %v863 = vpop.f32.mrb[0].mxu0
      %864 = vmatprep.mubr.bf16.mxu0 %v573
      %865 = vmatmul.mubr.bf16.gmra.mrb[0].mxu0 %v572
      %v866 = vpop.f32.mrb[0].mxu0
      %v867 = vadd.f32 %v398, %v866
      %v868 = vpop.f32.mrb[0].mxu0
      %v869 = vpop.f32.mrb[0].mxu0
      %v870 = vadd.f32 %v398, %v869
      %v871 = vpop.f32.mrb[0].mxu0
      %872 = vmatprep.mubr.bf16.mxu0 %v576
      %873 = vmatmul.mubr.bf16.gmra.mrb[0].mxu0 %v575
      %v874 = vpop.f32.mrb[0].mxu0
      %v875 = vadd.f32 %v398, %v874
      %v876 = vpop.f32.mrb[0].mxu0
      %v877 = vpop.f32.mrb[0].mxu0
      %v878 = vadd.f32 %v398, %v877
      %v879 = vpop.f32.mrb[0].mxu0
      %880 = vmatprep.mubr.bf16.mxu0 %v579
      %881 = vmatmul.mubr.bf16.gmra.mrb[0].mxu0 %v578
      %v882 = vpop.f32.mrb[0].mxu0
      %v883 = vadd.f32 %v398, %v882
      %v884 = vpop.f32.mrb[0].mxu0
      %v885 = vpop.f32.mrb[0].mxu0
      %v886 = vadd.f32 %v398, %v885
      %v887 = vpop.f32.mrb[0].mxu0
      %888 = vmatprep.mubr.bf16.mxu0 %v582
      %889 = vmatmul.mubr.bf16.gmra.mrb[0].mxu0 %v581
      %v890 = vpop.f32.mrb[0].mxu0
      %v891 = vadd.f32 %v398, %v890
      %v892 = vpop.f32.mrb[0].mxu0
      %v893 = vpop.f32.mrb[0].mxu0
      %v894 = vadd.f32 %v398, %v893
      %v895 = vpop.f32.mrb[0].mxu0
      %896 = vmatprep.mubr.bf16.mxu0 %v585
      %897 = vmatmul.mubr.bf16.gmra.mrb[0].mxu0 %v584
      %v898 = vpop.f32.mrb[0].mxu0
      %v899 = vadd.f32 %v398, %v898
      %v900 = vpop.f32.mrb[0].mxu0
      %v901 = vpop.f32.mrb[0].mxu0
      %v902 = vadd.f32 %v398, %v901
      %v903 = vpop.f32.mrb[0].mxu0
      %904 = vmatprep.mubr.bf16.mxu0 %v588
      %905 = vmatmul.mubr.bf16.gmra.mrb[0].mxu0 %v587
      %v906 = vpop.f32.mrb[0].mxu0
      %v907 = vadd.f32 %v398, %v906
      %v908 = vpop.f32.mrb[0].mxu0
      %v909 = vpop.f32.mrb[0].mxu0
      %v910 = vadd.f32 %v398, %v909
      %v911 = vpop.f32.mrb[0].mxu0
      %912 = vmatprep.mubr.bf16.mxu0 %v591
      %913 = vmatmul.mubr.bf16.gmra.mrb[0].mxu0 %v590
      %v914 = vpop.f32.mrb[0].mxu0
      %v915 = vadd.f32 %v398, %v914
      %v916 = vpop.f32.mrb[0].mxu0
      %v917 = vpop.f32.mrb[0].mxu0
      %v918 = vadd.f32 %v398, %v917
      %v919 = vpop.f32.mrb[0].mxu0
      %920 = vmatprep.mubr.bf16.mxu0 %v594
      %921 = vmatmul.mubr.bf16.gmra.mrb[0].mxu0 %v593
      %v922 = vpop.f32.mrb[0].mxu0
      %v923 = vadd.f32 %v398, %v922
      %v924 = vpop.f32.mrb[0].mxu0
      %v925 = vpop.f32.mrb[0].mxu0
      %v926 = vadd.f32 %v398, %v925
      %v927 = vpop.f32.mrb[0].mxu0
      %928 = vmatprep.mubr.bf16.mxu0 %v597
      %929 = vmatmul.mubr.bf16.gmra.mrb[0].mxu0 %v596
      %v930 = vpop.f32.mrb[0].mxu0
      %v931 = vadd.f32 %v398, %v930
      %v932 = vpop.f32.mrb[0].mxu0
      %v933 = vpop.f32.mrb[0].mxu0
      %v934 = vadd.f32 %v398, %v933
      %v935 = vpop.f32.mrb[0].mxu0
      %936 = vmatprep.mubr.bf16.mxu0 %v600
      %937 = vmatmul.mubr.bf16.gmra.mrb[0].mxu0 %v599
      %v938 = vpop.f32.mrb[0].mxu0
      %v939 = vadd.f32 %v398, %v938
      %v940 = vpop.f32.mrb[0].mxu0
      %v941 = vpop.f32.mrb[0].mxu0
      %v942 = vadd.f32 %v398, %v941
      %v943 = vpop.f32.mrb[0].mxu0
      %944 = vmatprep.mubr.bf16.mxu0 %v603
      %945 = vmatmul.mubr.bf16.gmra.mrb[0].mxu0 %v602
      %v946 = vpop.f32.mrb[0].mxu0
      %v947 = vadd.f32 %v398, %v946
      %v948 = vpop.f32.mrb[0].mxu0
      %v949 = vpop.f32.mrb[0].mxu0
      %v950 = vadd.f32 %v398, %v949
      %v951 = vpop.f32.mrb[0].mxu0
      %952 = vmatprep.mubr.bf16.mxu0 %v606
      %953 = vmatmul.mubr.bf16.gmra.mrb[0].mxu0 %v605
      %v954 = vpop.f32.mrb[0].mxu0
      %v955 = vadd.f32 %v398, %v954
      %v956 = vpop.f32.mrb[0].mxu0
      %v957 = vpop.f32.mrb[0].mxu0
      %v958 = vadd.f32 %v398, %v957
      %v959 = vpop.f32.mrb[0].mxu0
      %960 = vdwg.mxu0
      %961 = vmatprep.subr.bf16.mxu0 0
      %962 = vmatpush1.bf16.msra.mxu0 %v768
      %963 = vmatprep.subr.bf16.mxu0 0
      %964 = vmatpush1.bf16.msra.mxu0 %v769
      %965 = vmatprep.subr.bf16.mxu0 0
      %966 = vmatpush1.bf16.msra.mxu0 %v770
      %967 = vmatprep.subr.bf16.mxu0 0
      %968 = vmatpush1.bf16.msra.mxu0 %v771
      %969 = vmatprep.subr.bf16.mxu0 0
      %970 = vmatpush1.bf16.msra.mxu0 %v772
      %971 = vmatprep.subr.bf16.mxu0 0
      %972 = vmatpush1.bf16.msra.mxu0 %v773
      %973 = vmatprep.subr.bf16.mxu0 0
      %974 = vmatpush1.bf16.msra.mxu0 %v774
      %975 = vmatprep.subr.bf16.mxu0 0
      %976 = vmatpush1.bf16.msra.mxu0 %v775
      %977 = vmatprep.subr.bf16.mxu0 0
      %978 = vmatpush1.bf16.msra.mxu0 0
      %979 = vmatprep.subr.bf16.mxu0 0
      %980 = vmatpush1.bf16.msra.mxu0 0
      %981 = vmatprep.subr.bf16.mxu0 0
      %982 = vmatpush1.bf16.msra.mxu0 0
      %983 = vmatprep.subr.bf16.mxu0 0
      %984 = vmatpush1.bf16.msra.mxu0 0
      %985 = vmatprep.subr.bf16.mxu0 0
      %986 = vmatpush1.bf16.msra.mxu0 0
      %987 = vmatprep.subr.bf16.mxu0 0
      %988 = vmatpush1.bf16.msra.mxu0 0
      %989 = vmatprep.subr.bf16.mxu0 0
      %990 = vmatpush1.bf16.msra.mxu0 0
      %991 = vmatprep.subr.bf16.mxu0 0
      %992 = vmatpush1.bf16.msra.mxu0 0
      %993 = vmatprep.mubr.bf16.mxu0 0
      %994 = vmatmul.mubr.bf16.gmra.mrb[0].mxu0 %v562
      %v995 = vpop.f32.mrb[0].mxu0
      %v996 = vadd.f32 %v835, %v995
      %v997 = vpop.f32.mrb[0].mxu0
      %v998 = vpop.f32.mrb[0].mxu0
      %v999 = vadd.f32 %v838, %v998
      %v1000 = vpop.f32.mrb[0].mxu0
      %1001 = vmatprep.mubr.bf16.mxu0 0
      %1002 = vmatmul.mubr.bf16.gmra.mrb[0].mxu0 %v565
      %v1003 = vpop.f32.mrb[0].mxu0
      %v1004 = vadd.f32 %v843, %v1003
      %v1005 = vpop.f32.mrb[0].mxu0
      %v1006 = vpop.f32.mrb[0].mxu0
      %v1007 = vadd.f32 %v846, %v1006
      %v1008 = vpop.f32.mrb[0].mxu0
      %1009 = vmatprep.mubr.bf16.mxu0 0
      %1010 = vmatmul.mubr.bf16.gmra.mrb[0].mxu0 %v568
      %v1011 = vpop.f32.mrb[0].mxu0
      %v1012 = vadd.f32 %v851, %v1011
      %v1013 = vpop.f32.mrb[0].mxu0
      %v1014 = vpop.f32.mrb[0].mxu0
      %v1015 = vadd.f32 %v854, %v1014
      %v1016 = vpop.f32.mrb[0].mxu0
      %1017 = vmatprep.mubr.bf16.mxu0 0
      %1018 = vmatmul.mubr.bf16.gmra.mrb[0].mxu0 %v571
      %v1019 = vpop.f32.mrb[0].mxu0
      %v1020 = vadd.f32 %v859, %v1019
      %v1021 = vpop.f32.mrb[0].mxu0
      %v1022 = vpop.f32.mrb[0].mxu0
      %v1023 = vadd.f32 %v862, %v1022
      %v1024 = vpop.f32.mrb[0].mxu0
      %1025 = vmatprep.mubr.bf16.mxu0 0
      %1026 = vmatmul.mubr.bf16.gmra.mrb[0].mxu0 %v574
      %v1027 = vpop.f32.mrb[0].mxu0
      %v1028 = vadd.f32 %v867, %v1027
      %v1029 = vpop.f32.mrb[0].mxu0
      %v1030 = vpop.f32.mrb[0].mxu0
      %v1031 = vadd.f32 %v870, %v1030
      %v1032 = vpop.f32.mrb[0].mxu0
      %1033 = vmatprep.mubr.bf16.mxu0 0
      %1034 = vmatmul.mubr.bf16.gmra.mrb[0].mxu0 %v577
      %v1035 = vpop.f32.mrb[0].mxu0
      %v1036 = vadd.f32 %v875, %v1035
      %v1037 = vpop.f32.mrb[0].mxu0
      %v1038 = vpop.f32.mrb[0].mxu0
      %v1039 = vadd.f32 %v878, %v1038
      %v1040 = vpop.f32.mrb[0].mxu0
      %1041 = vmatprep.mubr.bf16.mxu0 0
      %1042 = vmatmul.mubr.bf16.gmra.mrb[0].mxu0 %v580
      %v1043 = vpop.f32.mrb[0].mxu0
      %v1044 = vadd.f32 %v883, %v1043
      %v1045 = vpop.f32.mrb[0].mxu0
      %v1046 = vpop.f32.mrb[0].mxu0
      %v1047 = vadd.f32 %v886, %v1046
      %v1048 = vpop.f32.mrb[0].mxu0
      %1049 = vmatprep.mubr.bf16.mxu0 0
      %1050 = vmatmul.mubr.bf16.gmra.mrb[0].mxu0 %v583
      %v1051 = vpop.f32.mrb[0].mxu0
      %v1052 = vadd.f32 %v891, %v1051
      %v1053 = vpop.f32.mrb[0].mxu0
      %v1054 = vpop.f32.mrb[0].mxu0
      %v1055 = vadd.f32 %v894, %v1054
      %v1056 = vpop.f32.mrb[0].mxu0
      %1057 = vmatprep.mubr.bf16.mxu0 0
      %1058 = vmatmul.mubr.bf16.gmra.mrb[0].mxu0 %v586
      %v1059 = vpop.f32.mrb[0].mxu0
      %v1060 = vadd.f32 %v899, %v1059
      %v1061 = vpop.f32.mrb[0].mxu0
      %v1062 = vpop.f32.mrb[0].mxu0
      %v1063 = vadd.f32 %v902, %v1062
      %v1064 = vpop.f32.mrb[0].mxu0
      %1065 = vmatprep.mubr.bf16.mxu0 0
      %1066 = vmatmul.mubr.bf16.gmra.mrb[0].mxu0 %v589
      %v1067 = vpop.f32.mrb[0].mxu0
      %v1068 = vadd.f32 %v907, %v1067
      %v1069 = vpop.f32.mrb[0].mxu0
      %v1070 = vpop.f32.mrb[0].mxu0
      %v1071 = vadd.f32 %v910, %v1070
      %v1072 = vpop.f32.mrb[0].mxu0
      %1073 = vmatprep.mubr.bf16.mxu0 0
      %1074 = vmatmul.mubr.bf16.gmra.mrb[0].mxu0 %v592
      %v1075 = vpop.f32.mrb[0].mxu0
      %v1076 = vadd.f32 %v915, %v1075
      %v1077 = vpop.f32.mrb[0].mxu0
      %v1078 = vpop.f32.mrb[0].mxu0
      %v1079 = vadd.f32 %v918, %v1078
      %v1080 = vpop.f32.mrb[0].mxu0
      %1081 = vmatprep.mubr.bf16.mxu0 0
      %1082 = vmatmul.mubr.bf16.gmra.mrb[0].mxu0 %v595
      %v1083 = vpop.f32.mrb[0].mxu0
      %v1084 = vadd.f32 %v923, %v1083
      %v1085 = vpop.f32.mrb[0].mxu0
      %v1086 = vpop.f32.mrb[0].mxu0
      %v1087 = vadd.f32 %v926, %v1086
      %v1088 = vpop.f32.mrb[0].mxu0
      %1089 = vmatprep.mubr.bf16.mxu0 0
      %1090 = vmatmul.mubr.bf16.gmra.mrb[0].mxu0 %v598
      %v1091 = vpop.f32.mrb[0].mxu0
      %v1092 = vadd.f32 %v931, %v1091
      %v1093 = vpop.f32.mrb[0].mxu0
      %v1094 = vpop.f32.mrb[0].mxu0
      %v1095 = vadd.f32 %v934, %v1094
      %v1096 = vpop.f32.mrb[0].mxu0
      %1097 = vmatprep.mubr.bf16.mxu0 0
      %1098 = vmatmul.mubr.bf16.gmra.mrb[0].mxu0 %v601
      %v1099 = vpop.f32.mrb[0].mxu0
      %v1100 = vadd.f32 %v939, %v1099
      %v1101 = vpop.f32.mrb[0].mxu0
      %v1102 = vpop.f32.mrb[0].mxu0
      %v1103 = vadd.f32 %v942, %v1102
      %v1104 = vpop.f32.mrb[0].mxu0
      %1105 = vmatprep.mubr.bf16.mxu0 0
      %1106 = vmatmul.mubr.bf16.gmra.mrb[0].mxu0 %v604
      %v1107 = vpop.f32.mrb[0].mxu0
      %v1108 = vadd.f32 %v947, %v1107
      %v1109 = vpop.f32.mrb[0].mxu0
      %v1110 = vpop.f32.mrb[0].mxu0
      %v1111 = vadd.f32 %v950, %v1110
      %v1112 = vpop.f32.mrb[0].mxu0
      %1113 = vmatprep.mubr.bf16.mxu0 0
      %1114 = vmatmul.mubr.bf16.gmra.mrb[0].mxu0 %v607
      %v1115 = vpop.f32.mrb[0].mxu0
      %v1116 = vadd.f32 %v955, %v1115
      %v1117 = vpop.f32.mrb[0].mxu0
      %v1118 = vpop.f32.mrb[0].mxu0
      %v1119 = vadd.f32 %v958, %v1118
      %v1120 = vpop.f32.mrb[0].mxu0
      %1121 = vdwg.mxu0
      %v1122 = vld [vmem:[%s272] sm:$0xff]
      %v1123 = vld [vmem:[%s272 + $0x8] sm:$0xff]
      %v1124 = vld [vmem:[%s272 + $0x10] sm:$0xff]
      %v1125 = vld [vmem:[%s272 + $0x18] sm:$0xff]
      %v1126 = vld [vmem:[%s272 + $0x20] sm:$0xff]
      %v1127 = vld [vmem:[%s272 + $0x28] sm:$0xff]
      %v1128 = vld [vmem:[%s272 + $0x30] sm:$0xff]
      %v1129 = vld [vmem:[%s272 + $0x38] sm:$0xff]
      %v1130 = vld [vmem:[%s272 + $0x40] sm:$0xff]
      %v1131 = vld [vmem:[%s272 + $0x48] sm:$0xff]
      %v1132 = vld [vmem:[%s272 + $0x50] sm:$0xff]
      %v1133 = vld [vmem:[%s272 + $0x58] sm:$0xff]
      %v1134 = vld [vmem:[%s272 + $0x60] sm:$0xff]
      %v1135 = vld [vmem:[%s272 + $0x68] sm:$0xff]
      %v1136 = vld [vmem:[%s272 + $0x70] sm:$0xff]
      %v1137 = vld [vmem:[%s272 + $0x78] sm:$0xff]
      %v1138 = vld [vmem:[%s272 + $0x80] sm:$0xff]
      %v1139 = vld [vmem:[%s272 + $0x88] sm:$0xff]
      %v1140 = vld [vmem:[%s272 + $0x90] sm:$0xff]
      %v1141 = vld [vmem:[%s272 + $0x98] sm:$0xff]
      %v1142 = vld [vmem:[%s272 + $0xa0] sm:$0xff]
      %v1143 = vld [vmem:[%s272 + $0xa8] sm:$0xff]
      %v1144 = vld [vmem:[%s272 + $0xb0] sm:$0xff]
      %v1145 = vld [vmem:[%s272 + $0xb8] sm:$0xff]
      %v1146 = vld [vmem:[%s272 + $0xc0] sm:$0xff]
      %v1147 = vld [vmem:[%s272 + $0xc8] sm:$0xff]
      %v1148 = vld [vmem:[%s272 + $0xd0] sm:$0xff]
      %v1149 = vld [vmem:[%s272 + $0xd8] sm:$0xff]
      %v1150 = vld [vmem:[%s272 + $0xe0] sm:$0xff]
      %v1151 = vld [vmem:[%s272 + $0xe8] sm:$0xff]
      %v1152 = vld [vmem:[%s272 + $0xf0] sm:$0xff]
      %v1153 = vld [vmem:[%s272 + $0xf8] sm:$0xff]
      %1186 = vrot.lane.b32.xlu0 %v1122, 32
      %v1187 = vpop.permute.xlu0 %1186
      %1188 = vrot.lane.b32.xlu0 %v1123, 32
      %v1189 = vpop.permute.xlu0 %1188
      %1190 = vrot.lane.b32.xlu0 %v1124, 32
      %v1191 = vpop.permute.xlu0 %1190
      %1192 = vrot.lane.b32.xlu0 %v1125, 32
      %v1193 = vpop.permute.xlu0 %1192
      %1194 = vrot.lane.b32.xlu0 %v1126, 32
      %v1195 = vpop.permute.xlu0 %1194
      %1196 = vrot.lane.b32.xlu0 %v1127, 32
      %v1197 = vpop.permute.xlu0 %1196
      %1198 = vrot.lane.b32.xlu0 %v1128, 32
      %v1199 = vpop.permute.xlu0 %1198
      %1200 = vrot.lane.b32.xlu0 %v1129, 32
      %v1201 = vpop.permute.xlu0 %1200
      %1202 = vrot.lane.b32.xlu0 %v1130, 32
      %v1203 = vpop.permute.xlu0 %1202
      %1204 = vrot.lane.b32.xlu0 %v1131, 32
      %v1205 = vpop.permute.xlu0 %1204
      %1206 = vrot.lane.b32.xlu0 %v1132, 32
      %v1207 = vpop.permute.xlu0 %1206
      %1208 = vrot.lane.b32.xlu0 %v1133, 32
      %v1209 = vpop.permute.xlu0 %1208
      %1210 = vrot.lane.b32.xlu0 %v1134, 32
      %v1211 = vpop.permute.xlu0 %1210
      %1212 = vrot.lane.b32.xlu0 %v1135, 32
      %v1213 = vpop.permute.xlu0 %1212
      %1214 = vrot.lane.b32.xlu0 %v1136, 32
      %v1215 = vpop.permute.xlu0 %1214
      %1216 = vrot.lane.b32.xlu0 %v1137, 32
      %v1217 = vpop.permute.xlu0 %1216
      %1218 = vrot.lane.b32.xlu0 %v1138, 32
      %v1219 = vpop.permute.xlu0 %1218
      %1220 = vrot.lane.b32.xlu0 %v1139, 32
      %v1221 = vpop.permute.xlu0 %1220
      %1222 = vrot.lane.b32.xlu0 %v1140, 32
      %v1223 = vpop.permute.xlu0 %1222
      %1224 = vrot.lane.b32.xlu0 %v1141, 32
      %v1225 = vpop.permute.xlu0 %1224
      %1226 = vrot.lane.b32.xlu0 %v1142, 32
      %v1227 = vpop.permute.xlu0 %1226
      %1228 = vrot.lane.b32.xlu0 %v1143, 32
      %v1229 = vpop.permute.xlu0 %1228
      %1230 = vrot.lane.b32.xlu0 %v1144, 32
      %v1231 = vpop.permute.xlu0 %1230
      %1232 = vrot.lane.b32.xlu0 %v1145, 32
      %v1233 = vpop.permute.xlu0 %1232
      %1234 = vrot.lane.b32.xlu0 %v1146, 32
      %v1235 = vpop.permute.xlu0 %1234
      %1236 = vrot.lane.b32.xlu0 %v1147, 32
      %v1237 = vpop.permute.xlu0 %1236
      %1238 = vrot.lane.b32.xlu0 %v1148, 32
      %v1239 = vpop.permute.xlu0 %1238
      %1240 = vrot.lane.b32.xlu0 %v1149, 32
      %v1241 = vpop.permute.xlu0 %1240
      %1242 = vrot.lane.b32.xlu0 %v1150, 32
      %v1243 = vpop.permute.xlu0 %1242
      %1244 = vrot.lane.b32.xlu0 %v1151, 32
      %v1245 = vpop.permute.xlu0 %1244
      %1246 = vrot.lane.b32.xlu0 %v1152, 32
      %v1247 = vpop.permute.xlu0 %1246
      %1248 = vrot.lane.b32.xlu0 %v1153, 32
      %v1249 = vpop.permute.xlu0 %1248
      %1282 = vrot.lane.b32.xlu0 %v1122, 64
      %v1283 = vpop.permute.xlu0 %1282
      %1284 = vrot.lane.b32.xlu0 %v1123, 64
      %v1285 = vpop.permute.xlu0 %1284
      %1286 = vrot.lane.b32.xlu0 %v1124, 64
      %v1287 = vpop.permute.xlu0 %1286
      %1288 = vrot.lane.b32.xlu0 %v1125, 64
      %v1289 = vpop.permute.xlu0 %1288
      %1290 = vrot.lane.b32.xlu0 %v1126, 64
      %v1291 = vpop.permute.xlu0 %1290
      %1292 = vrot.lane.b32.xlu0 %v1127, 64
      %v1293 = vpop.permute.xlu0 %1292
      %1294 = vrot.lane.b32.xlu0 %v1128, 64
      %v1295 = vpop.permute.xlu0 %1294
      %1296 = vrot.lane.b32.xlu0 %v1129, 64
      %v1297 = vpop.permute.xlu0 %1296
      %1298 = vrot.lane.b32.xlu0 %v1130, 64
      %v1299 = vpop.permute.xlu0 %1298
      %1300 = vrot.lane.b32.xlu0 %v1131, 64
      %v1301 = vpop.permute.xlu0 %1300
      %1302 = vrot.lane.b32.xlu0 %v1132, 64
      %v1303 = vpop.permute.xlu0 %1302
      %1304 = vrot.lane.b32.xlu0 %v1133, 64
      %v1305 = vpop.permute.xlu0 %1304
      %1306 = vrot.lane.b32.xlu0 %v1134, 64
      %v1307 = vpop.permute.xlu0 %1306
      %1308 = vrot.lane.b32.xlu0 %v1135, 64
      %v1309 = vpop.permute.xlu0 %1308
      %1310 = vrot.lane.b32.xlu0 %v1136, 64
      %v1311 = vpop.permute.xlu0 %1310
      %1312 = vrot.lane.b32.xlu0 %v1137, 64
      %v1313 = vpop.permute.xlu0 %1312
      %1314 = vrot.lane.b32.xlu0 %v1138, 64
      %v1315 = vpop.permute.xlu0 %1314
      %1316 = vrot.lane.b32.xlu0 %v1139, 64
      %v1317 = vpop.permute.xlu0 %1316
      %1318 = vrot.lane.b32.xlu0 %v1140, 64
      %v1319 = vpop.permute.xlu0 %1318
      %1320 = vrot.lane.b32.xlu0 %v1141, 64
      %v1321 = vpop.permute.xlu0 %1320
      %1322 = vrot.lane.b32.xlu0 %v1142, 64
      %v1323 = vpop.permute.xlu0 %1322
      %1324 = vrot.lane.b32.xlu0 %v1143, 64
      %v1325 = vpop.permute.xlu0 %1324
      %1326 = vrot.lane.b32.xlu0 %v1144, 64
      %v1327 = vpop.permute.xlu0 %1326
      %1328 = vrot.lane.b32.xlu0 %v1145, 64
      %v1329 = vpop.permute.xlu0 %1328
      %1330 = vrot.lane.b32.xlu0 %v1146, 64
      %v1331 = vpop.permute.xlu0 %1330
      %1332 = vrot.lane.b32.xlu0 %v1147, 64
      %v1333 = vpop.permute.xlu0 %1332
      %1334 = vrot.lane.b32.xlu0 %v1148, 64
      %v1335 = vpop.permute.xlu0 %1334
      %1336 = vrot.lane.b32.xlu0 %v1149, 64
      %v1337 = vpop.permute.xlu0 %1336
      %1338 = vrot.lane.b32.xlu0 %v1150, 64
      %v1339 = vpop.permute.xlu0 %1338
      %1340 = vrot.lane.b32.xlu0 %v1151, 64
      %v1341 = vpop.permute.xlu0 %1340
      %1342 = vrot.lane.b32.xlu0 %v1152, 64
      %v1343 = vpop.permute.xlu0 %1342
      %1344 = vrot.lane.b32.xlu0 %v1153, 64
      %v1345 = vpop.permute.xlu0 %1344
      %vm1378 = vcmask 261120
      %v1379 = vsel %vm1378, %v1122, %v1187
      %v1380 = vsel %vm1378, %v1123, %v1189
      %v1381 = vsel %vm1378, %v1124, %v1191
      %v1382 = vsel %vm1378, %v1125, %v1193
      %v1383 = vsel %vm1378, %v1126, %v1195
      %v1384 = vsel %vm1378, %v1127, %v1197
      %v1385 = vsel %vm1378, %v1128, %v1199
      %v1386 = vsel %vm1378, %v1129, %v1201
      %v1387 = vsel %vm1378, %v1130, %v1203
      %v1388 = vsel %vm1378, %v1131, %v1205
      %v1389 = vsel %vm1378, %v1132, %v1207
      %v1390 = vsel %vm1378, %v1133, %v1209
      %v1391 = vsel %vm1378, %v1134, %v1211
      %v1392 = vsel %vm1378, %v1135, %v1213
      %v1393 = vsel %vm1378, %v1136, %v1215
      %v1394 = vsel %vm1378, %v1137, %v1217
      %v1395 = vsel %vm1378, %v1138, %v1219
      %v1396 = vsel %vm1378, %v1139, %v1221
      %v1397 = vsel %vm1378, %v1140, %v1223
      %v1398 = vsel %vm1378, %v1141, %v1225
      %v1399 = vsel %vm1378, %v1142, %v1227
      %v1400 = vsel %vm1378, %v1143, %v1229
      %v1401 = vsel %vm1378, %v1144, %v1231
      %v1402 = vsel %vm1378, %v1145, %v1233
      %v1403 = vsel %vm1378, %v1146, %v1235
      %v1404 = vsel %vm1378, %v1147, %v1237
      %v1405 = vsel %vm1378, %v1148, %v1239
      %v1406 = vsel %vm1378, %v1149, %v1241
      %v1407 = vsel %vm1378, %v1150, %v1243
      %v1408 = vsel %vm1378, %v1151, %v1245
      %v1409 = vsel %vm1378, %v1152, %v1247
      %v1410 = vsel %vm1378, %v1153, %v1249
      %vm1411 = vcmask 523264
      %v1412 = vsel %vm1411, %v1379, %v1283
      %v1413 = vsel %vm1411, %v1380, %v1285
      %v1414 = vsel %vm1411, %v1381, %v1287
      %v1415 = vsel %vm1411, %v1382, %v1289
      %v1416 = vsel %vm1411, %v1383, %v1291
      %v1417 = vsel %vm1411, %v1384, %v1293
      %v1418 = vsel %vm1411, %v1385, %v1295
      %v1419 = vsel %vm1411, %v1386, %v1297
      %v1420 = vsel %vm1411, %v1387, %v1299
      %v1421 = vsel %vm1411, %v1388, %v1301
      %v1422 = vsel %vm1411, %v1389, %v1303
      %v1423 = vsel %vm1411, %v1390, %v1305
      %v1424 = vsel %vm1411, %v1391, %v1307
      %v1425 = vsel %vm1411, %v1392, %v1309
      %v1426 = vsel %vm1411, %v1393, %v1311
      %v1427 = vsel %vm1411, %v1394, %v1313
      %v1428 = vsel %vm1411, %v1395, %v1315
      %v1429 = vsel %vm1411, %v1396, %v1317
      %v1430 = vsel %vm1411, %v1397, %v1319
      %v1431 = vsel %vm1411, %v1398, %v1321
      %v1432 = vsel %vm1411, %v1399, %v1323
      %v1433 = vsel %vm1411, %v1400, %v1325
      %v1434 = vsel %vm1411, %v1401, %v1327
      %v1435 = vsel %vm1411, %v1402, %v1329
      %v1436 = vsel %vm1411, %v1403, %v1331
      %v1437 = vsel %vm1411, %v1404, %v1333
      %v1438 = vsel %vm1411, %v1405, %v1335
      %v1439 = vsel %vm1411, %v1406, %v1337
      %v1440 = vsel %vm1411, %v1407, %v1339
      %v1441 = vsel %vm1411, %v1408, %v1341
      %v1442 = vsel %vm1411, %v1409, %v1343
      %v1443 = vsel %vm1411, %v1410, %v1345
      %v1444 = vld [vmem:[%s4] sm:$0xff]
      %v1445 = vld [vmem:[%s4 + $0x8] sm:$0xff]
      %v1446 = vld [vmem:[%s4 + $0x10] sm:$0xff]
      %v1447 = vld [vmem:[%s4 + $0x18] sm:$0xff]
      %v1448 = vld [vmem:[%s4 + $0x20] sm:$0xff]
      %v1449 = vld [vmem:[%s4 + $0x28] sm:$0xff]
      %v1450 = vld [vmem:[%s4 + $0x30] sm:$0xff]
      %v1451 = vld [vmem:[%s4 + $0x38] sm:$0xff]
      %v1452 = vld [vmem:[%s4 + $0x40] sm:$0xff]
      %v1453 = vld [vmem:[%s4 + $0x48] sm:$0xff]
      %v1454 = vld [vmem:[%s4 + $0x50] sm:$0xff]
      %v1455 = vld [vmem:[%s4 + $0x58] sm:$0xff]
      %v1456 = vld [vmem:[%s4 + $0x60] sm:$0xff]
      %v1457 = vld [vmem:[%s4 + $0x68] sm:$0xff]
      %v1458 = vld [vmem:[%s4 + $0x70] sm:$0xff]
      %v1459 = vld [vmem:[%s4 + $0x78] sm:$0xff]
      %v1460 = vld [vmem:[%s4 + $0x80] sm:$0xff]
      %v1461 = vld [vmem:[%s4 + $0x88] sm:$0xff]
      %v1462 = vld [vmem:[%s4 + $0x90] sm:$0xff]
      %v1463 = vld [vmem:[%s4 + $0x98] sm:$0xff]
      %v1464 = vld [vmem:[%s4 + $0xa0] sm:$0xff]
      %v1465 = vld [vmem:[%s4 + $0xa8] sm:$0xff]
      %v1466 = vld [vmem:[%s4 + $0xb0] sm:$0xff]
      %v1467 = vld [vmem:[%s4 + $0xb8] sm:$0xff]
      %v1468 = vld [vmem:[%s4 + $0xc0] sm:$0xff]
      %v1469 = vld [vmem:[%s4 + $0xc8] sm:$0xff]
      %v1470 = vld [vmem:[%s4 + $0xd0] sm:$0xff]
      %v1471 = vld [vmem:[%s4 + $0xd8] sm:$0xff]
      %v1472 = vld [vmem:[%s4 + $0xe0] sm:$0xff]
      %v1473 = vld [vmem:[%s4 + $0xe8] sm:$0xff]
      %v1474 = vld [vmem:[%s4 + $0xf0] sm:$0xff]
      %v1475 = vld [vmem:[%s4 + $0xf8] sm:$0xff]
      %v1476 = vmul.f32 %v1444, %v1412
      %v1477 = vmul.f32 %v1445, %v1413
      %v1478 = vmul.f32 %v1446, %v1414
      %v1479 = vmul.f32 %v1447, %v1415
      %v1480 = vmul.f32 %v1448, %v1416
      %v1481 = vmul.f32 %v1449, %v1417
      %v1482 = vmul.f32 %v1450, %v1418
      %v1483 = vmul.f32 %v1451, %v1419
      %v1484 = vmul.f32 %v1452, %v1420
      %v1485 = vmul.f32 %v1453, %v1421
      %v1486 = vmul.f32 %v1454, %v1422
      %v1487 = vmul.f32 %v1455, %v1423
      %v1488 = vmul.f32 %v1456, %v1424
      %v1489 = vmul.f32 %v1457, %v1425
      %v1490 = vmul.f32 %v1458, %v1426
      %v1491 = vmul.f32 %v1459, %v1427
      %v1492 = vmul.f32 %v1460, %v1428
      %v1493 = vmul.f32 %v1461, %v1429
      %v1494 = vmul.f32 %v1462, %v1430
      %v1495 = vmul.f32 %v1463, %v1431
      %v1496 = vmul.f32 %v1464, %v1432
      %v1497 = vmul.f32 %v1465, %v1433
      %v1498 = vmul.f32 %v1466, %v1434
      %v1499 = vmul.f32 %v1467, %v1435
      %v1500 = vmul.f32 %v1468, %v1436
      %v1501 = vmul.f32 %v1469, %v1437
      %v1502 = vmul.f32 %v1470, %v1438
      %v1503 = vmul.f32 %v1471, %v1439
      %v1504 = vmul.f32 %v1472, %v1440
      %v1505 = vmul.f32 %v1473, %v1441
      %v1506 = vmul.f32 %v1474, %v1442
      %v1507 = vmul.f32 %v1475, %v1443
      %v1508 = vadd.f32 %v996, %v1476
      %v1509 = vadd.f32 %v999, %v1477
      %v1510 = vadd.f32 %v1004, %v1478
      %v1511 = vadd.f32 %v1007, %v1479
      %v1512 = vadd.f32 %v1012, %v1480
      %v1513 = vadd.f32 %v1015, %v1481
      %v1514 = vadd.f32 %v1020, %v1482
      %v1515 = vadd.f32 %v1023, %v1483
      %v1516 = vadd.f32 %v1028, %v1484
      %v1517 = vadd.f32 %v1031, %v1485
      %v1518 = vadd.f32 %v1036, %v1486
      %v1519 = vadd.f32 %v1039, %v1487
      %v1520 = vadd.f32 %v1044, %v1488
      %v1521 = vadd.f32 %v1047, %v1489
      %v1522 = vadd.f32 %v1052, %v1490
      %v1523 = vadd.f32 %v1055, %v1491
      %v1524 = vadd.f32 %v1060, %v1492
      %v1525 = vadd.f32 %v1063, %v1493
      %v1526 = vadd.f32 %v1068, %v1494
      %v1527 = vadd.f32 %v1071, %v1495
      %v1528 = vadd.f32 %v1076, %v1496
      %v1529 = vadd.f32 %v1079, %v1497
      %v1530 = vadd.f32 %v1084, %v1498
      %v1531 = vadd.f32 %v1087, %v1499
      %v1532 = vadd.f32 %v1092, %v1500
      %v1533 = vadd.f32 %v1095, %v1501
      %v1534 = vadd.f32 %v1100, %v1502
      %v1535 = vadd.f32 %v1103, %v1503
      %v1536 = vadd.f32 %v1108, %v1504
      %v1537 = vadd.f32 %v1111, %v1505
      %v1538 = vadd.f32 %v1116, %v1506
      %v1539 = vadd.f32 %v1119, %v1507
      %v1540 = vxor.u32 %v1508, 2147483648
      %v1541 = vxor.u32 %v1509, 2147483648
      %v1542 = vxor.u32 %v1510, 2147483648
      %v1543 = vxor.u32 %v1511, 2147483648
      %v1544 = vxor.u32 %v1512, 2147483648
      %v1545 = vxor.u32 %v1513, 2147483648
      %v1546 = vxor.u32 %v1514, 2147483648
      %v1547 = vxor.u32 %v1515, 2147483648
      %v1548 = vxor.u32 %v1516, 2147483648
      %v1549 = vxor.u32 %v1517, 2147483648
      %v1550 = vxor.u32 %v1518, 2147483648
      %v1551 = vxor.u32 %v1519, 2147483648
      %v1552 = vxor.u32 %v1520, 2147483648
      %v1553 = vxor.u32 %v1521, 2147483648
      %v1554 = vxor.u32 %v1522, 2147483648
      %v1555 = vxor.u32 %v1523, 2147483648
      %v1556 = vxor.u32 %v1524, 2147483648
      %v1557 = vxor.u32 %v1525, 2147483648
      %v1558 = vxor.u32 %v1526, 2147483648
      %v1559 = vxor.u32 %v1527, 2147483648
      %v1560 = vxor.u32 %v1528, 2147483648
      %v1561 = vxor.u32 %v1529, 2147483648
      %v1562 = vxor.u32 %v1530, 2147483648
      %v1563 = vxor.u32 %v1531, 2147483648
      %v1564 = vxor.u32 %v1532, 2147483648
      %v1565 = vxor.u32 %v1533, 2147483648
      %v1566 = vxor.u32 %v1534, 2147483648
      %v1567 = vxor.u32 %v1535, 2147483648
      %v1568 = vxor.u32 %v1536, 2147483648
      %v1569 = vxor.u32 %v1537, 2147483648
      %v1570 = vxor.u32 %v1538, 2147483648
      %v1571 = vxor.u32 %v1539, 2147483648
      %v1572 = vmul.f32 %v1540, 1.442695
      %v1573 = vpow.pop %v1572
      %v1574 = vmul.f32 %v1541, 1.442695
      %v1575 = vpow.pop %v1574
      %v1576 = vmul.f32 %v1542, 1.442695
      %v1577 = vpow.pop %v1576
      %v1578 = vmul.f32 %v1543, 1.442695
      %v1579 = vpow.pop %v1578
      %v1580 = vmul.f32 %v1544, 1.442695
      %v1581 = vpow.pop %v1580
      %v1582 = vmul.f32 %v1545, 1.442695
      %v1583 = vpow.pop %v1582
      %v1584 = vmul.f32 %v1546, 1.442695
      %v1585 = vpow.pop %v1584
      %v1586 = vmul.f32 %v1547, 1.442695
      %v1587 = vpow.pop %v1586
      %v1588 = vmul.f32 %v1548, 1.442695
      %v1589 = vpow.pop %v1588
      %v1590 = vmul.f32 %v1549, 1.442695
      %v1591 = vpow.pop %v1590
      %v1592 = vmul.f32 %v1550, 1.442695
      %v1593 = vpow.pop %v1592
      %v1594 = vmul.f32 %v1551, 1.442695
      %v1595 = vpow.pop %v1594
      %v1596 = vmul.f32 %v1552, 1.442695
      %v1597 = vpow.pop %v1596
      %v1598 = vmul.f32 %v1553, 1.442695
      %v1599 = vpow.pop %v1598
      %v1600 = vmul.f32 %v1554, 1.442695
      %v1601 = vpow.pop %v1600
      %v1602 = vmul.f32 %v1555, 1.442695
      %v1603 = vpow.pop %v1602
      %v1604 = vmul.f32 %v1556, 1.442695
      %v1605 = vpow.pop %v1604
      %v1606 = vmul.f32 %v1557, 1.442695
      %v1607 = vpow.pop %v1606
      %v1608 = vmul.f32 %v1558, 1.442695
      %v1609 = vpow.pop %v1608
      %v1610 = vmul.f32 %v1559, 1.442695
      %v1611 = vpow.pop %v1610
      %v1612 = vmul.f32 %v1560, 1.442695
      %v1613 = vpow.pop %v1612
      %v1614 = vmul.f32 %v1561, 1.442695
      %v1615 = vpow.pop %v1614
      %v1616 = vmul.f32 %v1562, 1.442695
      %v1617 = vpow.pop %v1616
      %v1618 = vmul.f32 %v1563, 1.442695
      %v1619 = vpow.pop %v1618
      %v1620 = vmul.f32 %v1564, 1.442695
      %v1621 = vpow.pop %v1620
      %v1622 = vmul.f32 %v1565, 1.442695
      %v1623 = vpow.pop %v1622
      %v1624 = vmul.f32 %v1566, 1.442695
      %v1625 = vpow.pop %v1624
      %v1626 = vmul.f32 %v1567, 1.442695
      %v1627 = vpow.pop %v1626
      %v1628 = vmul.f32 %v1568, 1.442695
      %v1629 = vpow.pop %v1628
      %v1630 = vmul.f32 %v1569, 1.442695
      %v1631 = vpow.pop %v1630
      %v1632 = vmul.f32 %v1570, 1.442695
      %v1633 = vpow.pop %v1632
      %v1634 = vmul.f32 %v1571, 1.442695
      %v1635 = vpow.pop %v1634
      %v1636 = vadd.f32 %v1573, 1.0
      %v1637 = vadd.f32 %v1575, 1.0
      %v1638 = vadd.f32 %v1577, 1.0
      %v1639 = vadd.f32 %v1579, 1.0
      %v1640 = vadd.f32 %v1581, 1.0
      %v1641 = vadd.f32 %v1583, 1.0
      %v1642 = vadd.f32 %v1585, 1.0
      %v1643 = vadd.f32 %v1587, 1.0
      %v1644 = vadd.f32 %v1589, 1.0
      %v1645 = vadd.f32 %v1591, 1.0
      %v1646 = vadd.f32 %v1593, 1.0
      %v1647 = vadd.f32 %v1595, 1.0
      %v1648 = vadd.f32 %v1597, 1.0
      %v1649 = vadd.f32 %v1599, 1.0
      %v1650 = vadd.f32 %v1601, 1.0
      %v1651 = vadd.f32 %v1603, 1.0
      %v1652 = vadd.f32 %v1605, 1.0
      %v1653 = vadd.f32 %v1607, 1.0
      %v1654 = vadd.f32 %v1609, 1.0
      %v1655 = vadd.f32 %v1611, 1.0
      %v1656 = vadd.f32 %v1613, 1.0
      %v1657 = vadd.f32 %v1615, 1.0
      %v1658 = vadd.f32 %v1617, 1.0
      %v1659 = vadd.f32 %v1619, 1.0
      %v1660 = vadd.f32 %v1621, 1.0
      %v1661 = vadd.f32 %v1623, 1.0
      %v1662 = vadd.f32 %v1625, 1.0
      %v1663 = vadd.f32 %v1627, 1.0
      %v1664 = vadd.f32 %v1629, 1.0
      %v1665 = vadd.f32 %v1631, 1.0
      %v1666 = vadd.f32 %v1633, 1.0
      %v1667 = vadd.f32 %v1635, 1.0
      %v1668 = vrcp.pop %v1636
      %v1669 = vmul.f32 1.0, %v1668
      %v1670 = vrcp.pop %v1637
      %v1671 = vmul.f32 1.0, %v1670
      %v1672 = vrcp.pop %v1638
      %v1673 = vmul.f32 1.0, %v1672
      %v1674 = vrcp.pop %v1639
      %v1675 = vmul.f32 1.0, %v1674
      %v1676 = vrcp.pop %v1640
      %v1677 = vmul.f32 1.0, %v1676
      %v1678 = vrcp.pop %v1641
      %v1679 = vmul.f32 1.0, %v1678
      %v1680 = vrcp.pop %v1642
      %v1681 = vmul.f32 1.0, %v1680
      %v1682 = vrcp.pop %v1643
      %v1683 = vmul.f32 1.0, %v1682
      %v1684 = vrcp.pop %v1644
      %v1685 = vmul.f32 1.0, %v1684
      %v1686 = vrcp.pop %v1645
      %v1687 = vmul.f32 1.0, %v1686
      %v1688 = vrcp.pop %v1646
      %v1689 = vmul.f32 1.0, %v1688
      %v1690 = vrcp.pop %v1647
      %v1691 = vmul.f32 1.0, %v1690
      %v1692 = vrcp.pop %v1648
      %v1693 = vmul.f32 1.0, %v1692
      %v1694 = vrcp.pop %v1649
      %v1695 = vmul.f32 1.0, %v1694
      %v1696 = vrcp.pop %v1650
      %v1697 = vmul.f32 1.0, %v1696
      %v1698 = vrcp.pop %v1651
      %v1699 = vmul.f32 1.0, %v1698
      %v1700 = vrcp.pop %v1652
      %v1701 = vmul.f32 1.0, %v1700
      %v1702 = vrcp.pop %v1653
      %v1703 = vmul.f32 1.0, %v1702
      %v1704 = vrcp.pop %v1654
      %v1705 = vmul.f32 1.0, %v1704
      %v1706 = vrcp.pop %v1655
      %v1707 = vmul.f32 1.0, %v1706
      %v1708 = vrcp.pop %v1656
      %v1709 = vmul.f32 1.0, %v1708
      %v1710 = vrcp.pop %v1657
      %v1711 = vmul.f32 1.0, %v1710
      %v1712 = vrcp.pop %v1658
      %v1713 = vmul.f32 1.0, %v1712
      %v1714 = vrcp.pop %v1659
      %v1715 = vmul.f32 1.0, %v1714
      %v1716 = vrcp.pop %v1660
      %v1717 = vmul.f32 1.0, %v1716
      %v1718 = vrcp.pop %v1661
      %v1719 = vmul.f32 1.0, %v1718
      %v1720 = vrcp.pop %v1662
      %v1721 = vmul.f32 1.0, %v1720
      %v1722 = vrcp.pop %v1663
      %v1723 = vmul.f32 1.0, %v1722
      %v1724 = vrcp.pop %v1664
      %v1725 = vmul.f32 1.0, %v1724
      %v1726 = vrcp.pop %v1665
      %v1727 = vmul.f32 1.0, %v1726
      %v1728 = vrcp.pop %v1666
      %v1729 = vmul.f32 1.0, %v1728
      %v1730 = vrcp.pop %v1667
      %v1731 = vmul.f32 1.0, %v1730
      %v1732 = vmul.f32 %v1669, 2.0
      %v1733 = vmul.f32 %v1671, 2.0
      %v1734 = vmul.f32 %v1673, 2.0
      %v1735 = vmul.f32 %v1675, 2.0
      %v1736 = vmul.f32 %v1677, 2.0
      %v1737 = vmul.f32 %v1679, 2.0
      %v1738 = vmul.f32 %v1681, 2.0
      %v1739 = vmul.f32 %v1683, 2.0
      %v1740 = vmul.f32 %v1685, 2.0
      %v1741 = vmul.f32 %v1687, 2.0
      %v1742 = vmul.f32 %v1689, 2.0
      %v1743 = vmul.f32 %v1691, 2.0
      %v1744 = vmul.f32 %v1693, 2.0
      %v1745 = vmul.f32 %v1695, 2.0
      %v1746 = vmul.f32 %v1697, 2.0
      %v1747 = vmul.f32 %v1699, 2.0
      %v1748 = vmul.f32 %v1701, 2.0
      %v1749 = vmul.f32 %v1703, 2.0
      %v1750 = vmul.f32 %v1705, 2.0
      %v1751 = vmul.f32 %v1707, 2.0
      %v1752 = vmul.f32 %v1709, 2.0
      %v1753 = vmul.f32 %v1711, 2.0
      %v1754 = vmul.f32 %v1713, 2.0
      %v1755 = vmul.f32 %v1715, 2.0
      %v1756 = vmul.f32 %v1717, 2.0
      %v1757 = vmul.f32 %v1719, 2.0
      %v1758 = vmul.f32 %v1721, 2.0
      %v1759 = vmul.f32 %v1723, 2.0
      %v1760 = vmul.f32 %v1725, 2.0
      %v1761 = vmul.f32 %v1727, 2.0
      %v1762 = vmul.f32 %v1729, 2.0
      %v1763 = vmul.f32 %v1731, 2.0
      %v1764 = vsub.f32 %v1732, 1.0
      %v1765 = vsub.f32 %v1733, 1.0
      %v1766 = vsub.f32 %v1734, 1.0
      %v1767 = vsub.f32 %v1735, 1.0
      %v1768 = vsub.f32 %v1736, 1.0
      %v1769 = vsub.f32 %v1737, 1.0
      %v1770 = vsub.f32 %v1738, 1.0
      %v1771 = vsub.f32 %v1739, 1.0
      %v1772 = vsub.f32 %v1740, 1.0
      %v1773 = vsub.f32 %v1741, 1.0
      %v1774 = vsub.f32 %v1742, 1.0
      %v1775 = vsub.f32 %v1743, 1.0
      %v1776 = vsub.f32 %v1744, 1.0
      %v1777 = vsub.f32 %v1745, 1.0
      %v1778 = vsub.f32 %v1746, 1.0
      %v1779 = vsub.f32 %v1747, 1.0
      %v1780 = vsub.f32 %v1748, 1.0
      %v1781 = vsub.f32 %v1749, 1.0
      %v1782 = vsub.f32 %v1750, 1.0
      %v1783 = vsub.f32 %v1751, 1.0
      %v1784 = vsub.f32 %v1752, 1.0
      %v1785 = vsub.f32 %v1753, 1.0
      %v1786 = vsub.f32 %v1754, 1.0
      %v1787 = vsub.f32 %v1755, 1.0
      %v1788 = vsub.f32 %v1756, 1.0
      %v1789 = vsub.f32 %v1757, 1.0
      %v1790 = vsub.f32 %v1758, 1.0
      %v1791 = vsub.f32 %v1759, 1.0
      %v1792 = vsub.f32 %v1760, 1.0
      %v1793 = vsub.f32 %v1761, 1.0
      %v1794 = vsub.f32 %v1762, 1.0
      %v1795 = vsub.f32 %v1763, 1.0
      %v1796 = vmul.f32 %v1669, %v1187
      %v1797 = vmul.f32 %v1671, %v1189
      %v1798 = vmul.f32 %v1673, %v1191
      %v1799 = vmul.f32 %v1675, %v1193
      %v1800 = vmul.f32 %v1677, %v1195
      %v1801 = vmul.f32 %v1679, %v1197
      %v1802 = vmul.f32 %v1681, %v1199
      %v1803 = vmul.f32 %v1683, %v1201
      %v1804 = vmul.f32 %v1685, %v1203
      %v1805 = vmul.f32 %v1687, %v1205
      %v1806 = vmul.f32 %v1689, %v1207
      %v1807 = vmul.f32 %v1691, %v1209
      %v1808 = vmul.f32 %v1693, %v1211
      %v1809 = vmul.f32 %v1695, %v1213
      %v1810 = vmul.f32 %v1697, %v1215
      %v1811 = vmul.f32 %v1699, %v1217
      %v1812 = vmul.f32 %v1701, %v1219
      %v1813 = vmul.f32 %v1703, %v1221
      %v1814 = vmul.f32 %v1705, %v1223
      %v1815 = vmul.f32 %v1707, %v1225
      %v1816 = vmul.f32 %v1709, %v1227
      %v1817 = vmul.f32 %v1711, %v1229
      %v1818 = vmul.f32 %v1713, %v1231
      %v1819 = vmul.f32 %v1715, %v1233
      %v1820 = vmul.f32 %v1717, %v1235
      %v1821 = vmul.f32 %v1719, %v1237
      %v1822 = vmul.f32 %v1721, %v1239
      %v1823 = vmul.f32 %v1723, %v1241
      %v1824 = vmul.f32 %v1725, %v1243
      %v1825 = vmul.f32 %v1727, %v1245
      %v1826 = vmul.f32 %v1729, %v1247
      %v1827 = vmul.f32 %v1731, %v1249
      %1860 = vrot.lane.b32.xlu0 %v1764, 64
      %v1861 = vpop.permute.xlu0 %1860
      %1862 = vrot.lane.b32.xlu0 %v1765, 64
      %v1863 = vpop.permute.xlu0 %1862
      %1864 = vrot.lane.b32.xlu0 %v1766, 64
      %v1865 = vpop.permute.xlu0 %1864
      %1866 = vrot.lane.b32.xlu0 %v1767, 64
      %v1867 = vpop.permute.xlu0 %1866
      %1868 = vrot.lane.b32.xlu0 %v1768, 64
      %v1869 = vpop.permute.xlu0 %1868
      %1870 = vrot.lane.b32.xlu0 %v1769, 64
      %v1871 = vpop.permute.xlu0 %1870
      %1872 = vrot.lane.b32.xlu0 %v1770, 64
      %v1873 = vpop.permute.xlu0 %1872
      %1874 = vrot.lane.b32.xlu0 %v1771, 64
      %v1875 = vpop.permute.xlu0 %1874
      %1876 = vrot.lane.b32.xlu0 %v1772, 64
      %v1877 = vpop.permute.xlu0 %1876
      %1878 = vrot.lane.b32.xlu0 %v1773, 64
      %v1879 = vpop.permute.xlu0 %1878
      %1880 = vrot.lane.b32.xlu0 %v1774, 64
      %v1881 = vpop.permute.xlu0 %1880
      %1882 = vrot.lane.b32.xlu0 %v1775, 64
      %v1883 = vpop.permute.xlu0 %1882
      %1884 = vrot.lane.b32.xlu0 %v1776, 64
      %v1885 = vpop.permute.xlu0 %1884
      %1886 = vrot.lane.b32.xlu0 %v1777, 64
      %v1887 = vpop.permute.xlu0 %1886
      %1888 = vrot.lane.b32.xlu0 %v1778, 64
      %v1889 = vpop.permute.xlu0 %1888
      %1890 = vrot.lane.b32.xlu0 %v1779, 64
      %v1891 = vpop.permute.xlu0 %1890
      %1892 = vrot.lane.b32.xlu0 %v1780, 64
      %v1893 = vpop.permute.xlu0 %1892
      %1894 = vrot.lane.b32.xlu0 %v1781, 64
      %v1895 = vpop.permute.xlu0 %1894
      %1896 = vrot.lane.b32.xlu0 %v1782, 64
      %v1897 = vpop.permute.xlu0 %1896
      %1898 = vrot.lane.b32.xlu0 %v1783, 64
      %v1899 = vpop.permute.xlu0 %1898
      %1900 = vrot.lane.b32.xlu0 %v1784, 64
      %v1901 = vpop.permute.xlu0 %1900
      %1902 = vrot.lane.b32.xlu0 %v1785, 64
      %v1903 = vpop.permute.xlu0 %1902
      %1904 = vrot.lane.b32.xlu0 %v1786, 64
      %v1905 = vpop.permute.xlu0 %1904
      %1906 = vrot.lane.b32.xlu0 %v1787, 64
      %v1907 = vpop.permute.xlu0 %1906
      %1908 = vrot.lane.b32.xlu0 %v1788, 64
      %v1909 = vpop.permute.xlu0 %1908
      %1910 = vrot.lane.b32.xlu0 %v1789, 64
      %v1911 = vpop.permute.xlu0 %1910
      %1912 = vrot.lane.b32.xlu0 %v1790, 64
      %v1913 = vpop.permute.xlu0 %1912
      %1914 = vrot.lane.b32.xlu0 %v1791, 64
      %v1915 = vpop.permute.xlu0 %1914
      %1916 = vrot.lane.b32.xlu0 %v1792, 64
      %v1917 = vpop.permute.xlu0 %1916
      %1918 = vrot.lane.b32.xlu0 %v1793, 64
      %v1919 = vpop.permute.xlu0 %1918
      %1920 = vrot.lane.b32.xlu0 %v1794, 64
      %v1921 = vpop.permute.xlu0 %1920
      %1922 = vrot.lane.b32.xlu0 %v1795, 64
      %v1923 = vpop.permute.xlu0 %1922
      %v1956 = vmul.f32 %v1669, %v1861
      %v1957 = vmul.f32 %v1671, %v1863
      %v1958 = vmul.f32 %v1673, %v1865
      %v1959 = vmul.f32 %v1675, %v1867
      %v1960 = vmul.f32 %v1677, %v1869
      %v1961 = vmul.f32 %v1679, %v1871
      %v1962 = vmul.f32 %v1681, %v1873
      %v1963 = vmul.f32 %v1683, %v1875
      %v1964 = vmul.f32 %v1685, %v1877
      %v1965 = vmul.f32 %v1687, %v1879
      %v1966 = vmul.f32 %v1689, %v1881
      %v1967 = vmul.f32 %v1691, %v1883
      %v1968 = vmul.f32 %v1693, %v1885
      %v1969 = vmul.f32 %v1695, %v1887
      %v1970 = vmul.f32 %v1697, %v1889
      %v1971 = vmul.f32 %v1699, %v1891
      %v1972 = vmul.f32 %v1701, %v1893
      %v1973 = vmul.f32 %v1703, %v1895
      %v1974 = vmul.f32 %v1705, %v1897
      %v1975 = vmul.f32 %v1707, %v1899
      %v1976 = vmul.f32 %v1709, %v1901
      %v1977 = vmul.f32 %v1711, %v1903
      %v1978 = vmul.f32 %v1713, %v1905
      %v1979 = vmul.f32 %v1715, %v1907
      %v1980 = vmul.f32 %v1717, %v1909
      %v1981 = vmul.f32 %v1719, %v1911
      %v1982 = vmul.f32 %v1721, %v1913
      %v1983 = vmul.f32 %v1723, %v1915
      %v1984 = vmul.f32 %v1725, %v1917
      %v1985 = vmul.f32 %v1727, %v1919
      %v1986 = vmul.f32 %v1729, %v1921
      %v1987 = vmul.f32 %v1731, %v1923
      %2020 = vrot.lane.b32.xlu0 %v1956, 32
      %v2021 = vpop.permute.xlu0 %2020
      %2022 = vrot.lane.b32.xlu0 %v1957, 32
      %v2023 = vpop.permute.xlu0 %2022
      %2024 = vrot.lane.b32.xlu0 %v1958, 32
      %v2025 = vpop.permute.xlu0 %2024
      %2026 = vrot.lane.b32.xlu0 %v1959, 32
      %v2027 = vpop.permute.xlu0 %2026
      %2028 = vrot.lane.b32.xlu0 %v1960, 32
      %v2029 = vpop.permute.xlu0 %2028
      %2030 = vrot.lane.b32.xlu0 %v1961, 32
      %v2031 = vpop.permute.xlu0 %2030
      %2032 = vrot.lane.b32.xlu0 %v1962, 32
      %v2033 = vpop.permute.xlu0 %2032
      %2034 = vrot.lane.b32.xlu0 %v1963, 32
      %v2035 = vpop.permute.xlu0 %2034
      %2036 = vrot.lane.b32.xlu0 %v1964, 32
      %v2037 = vpop.permute.xlu0 %2036
      %2038 = vrot.lane.b32.xlu0 %v1965, 32
      %v2039 = vpop.permute.xlu0 %2038
      %2040 = vrot.lane.b32.xlu0 %v1966, 32
      %v2041 = vpop.permute.xlu0 %2040
      %2042 = vrot.lane.b32.xlu0 %v1967, 32
      %v2043 = vpop.permute.xlu0 %2042
      %2044 = vrot.lane.b32.xlu0 %v1968, 32
      %v2045 = vpop.permute.xlu0 %2044
      %2046 = vrot.lane.b32.xlu0 %v1969, 32
      %v2047 = vpop.permute.xlu0 %2046
      %2048 = vrot.lane.b32.xlu0 %v1970, 32
      %v2049 = vpop.permute.xlu0 %2048
      %2050 = vrot.lane.b32.xlu0 %v1971, 32
      %v2051 = vpop.permute.xlu0 %2050
      %2052 = vrot.lane.b32.xlu0 %v1972, 32
      %v2053 = vpop.permute.xlu0 %2052
      %2054 = vrot.lane.b32.xlu0 %v1973, 32
      %v2055 = vpop.permute.xlu0 %2054
      %2056 = vrot.lane.b32.xlu0 %v1974, 32
      %v2057 = vpop.permute.xlu0 %2056
      %2058 = vrot.lane.b32.xlu0 %v1975, 32
      %v2059 = vpop.permute.xlu0 %2058
      %2060 = vrot.lane.b32.xlu0 %v1976, 32
      %v2061 = vpop.permute.xlu0 %2060
      %2062 = vrot.lane.b32.xlu0 %v1977, 32
      %v2063 = vpop.permute.xlu0 %2062
      %2064 = vrot.lane.b32.xlu0 %v1978, 32
      %v2065 = vpop.permute.xlu0 %2064
      %2066 = vrot.lane.b32.xlu0 %v1979, 32
      %v2067 = vpop.permute.xlu0 %2066
      %2068 = vrot.lane.b32.xlu0 %v1980, 32
      %v2069 = vpop.permute.xlu0 %2068
      %2070 = vrot.lane.b32.xlu0 %v1981, 32
      %v2071 = vpop.permute.xlu0 %2070
      %2072 = vrot.lane.b32.xlu0 %v1982, 32
      %v2073 = vpop.permute.xlu0 %2072
      %2074 = vrot.lane.b32.xlu0 %v1983, 32
      %v2075 = vpop.permute.xlu0 %2074
      %2076 = vrot.lane.b32.xlu0 %v1984, 32
      %v2077 = vpop.permute.xlu0 %2076
      %2078 = vrot.lane.b32.xlu0 %v1985, 32
      %v2079 = vpop.permute.xlu0 %2078
      %2080 = vrot.lane.b32.xlu0 %v1986, 32
      %v2081 = vpop.permute.xlu0 %2080
      %2082 = vrot.lane.b32.xlu0 %v1987, 32
      %v2083 = vpop.permute.xlu0 %2082
      %v2116 = vadd.f32 %v1796, %v2021
      %v2117 = vadd.f32 %v1797, %v2023
      %v2118 = vadd.f32 %v1798, %v2025
      %v2119 = vadd.f32 %v1799, %v2027
      %v2120 = vadd.f32 %v1800, %v2029
      %v2121 = vadd.f32 %v1801, %v2031
      %v2122 = vadd.f32 %v1802, %v2033
      %v2123 = vadd.f32 %v1803, %v2035
      %v2124 = vadd.f32 %v1804, %v2037
      %v2125 = vadd.f32 %v1805, %v2039
      %v2126 = vadd.f32 %v1806, %v2041
      %v2127 = vadd.f32 %v1807, %v2043
      %v2128 = vadd.f32 %v1808, %v2045
      %v2129 = vadd.f32 %v1809, %v2047
      %v2130 = vadd.f32 %v1810, %v2049
      %v2131 = vadd.f32 %v1811, %v2051
      %v2132 = vadd.f32 %v1812, %v2053
      %v2133 = vadd.f32 %v1813, %v2055
      %v2134 = vadd.f32 %v1814, %v2057
      %v2135 = vadd.f32 %v1815, %v2059
      %v2136 = vadd.f32 %v1816, %v2061
      %v2137 = vadd.f32 %v1817, %v2063
      %v2138 = vadd.f32 %v1818, %v2065
      %v2139 = vadd.f32 %v1819, %v2067
      %v2140 = vadd.f32 %v1820, %v2069
      %v2141 = vadd.f32 %v1821, %v2071
      %v2142 = vadd.f32 %v1822, %v2073
      %v2143 = vadd.f32 %v1823, %v2075
      %v2144 = vadd.f32 %v1824, %v2077
      %v2145 = vadd.f32 %v1825, %v2079
      %v2146 = vadd.f32 %v1826, %v2081
      %v2147 = vadd.f32 %v1827, %v2083
      %v2148 = vld [vmem:[%s5] sm:$0xff]
      %v2149 = vld [vmem:[%s5 + $0x8] sm:$0xff]
      %v2150 = vld [vmem:[%s5 + $0x10] sm:$0xff]
      %v2151 = vld [vmem:[%s5 + $0x18] sm:$0xff]
      %v2152 = vld [vmem:[%s5 + $0x20] sm:$0xff]
      %v2153 = vld [vmem:[%s5 + $0x28] sm:$0xff]
      %v2154 = vld [vmem:[%s5 + $0x30] sm:$0xff]
      %v2155 = vld [vmem:[%s5 + $0x38] sm:$0xff]
      %v2156 = vld [vmem:[%s5 + $0x40] sm:$0xff]
      %v2157 = vld [vmem:[%s5 + $0x48] sm:$0xff]
      %v2158 = vld [vmem:[%s5 + $0x50] sm:$0xff]
      %v2159 = vld [vmem:[%s5 + $0x58] sm:$0xff]
      %v2160 = vld [vmem:[%s5 + $0x60] sm:$0xff]
      %v2161 = vld [vmem:[%s5 + $0x68] sm:$0xff]
      %v2162 = vld [vmem:[%s5 + $0x70] sm:$0xff]
      %v2163 = vld [vmem:[%s5 + $0x78] sm:$0xff]
      %v2164 = vld [vmem:[%s5 + $0x80] sm:$0xff]
      %v2165 = vld [vmem:[%s5 + $0x88] sm:$0xff]
      %v2166 = vld [vmem:[%s5 + $0x90] sm:$0xff]
      %v2167 = vld [vmem:[%s5 + $0x98] sm:$0xff]
      %v2168 = vld [vmem:[%s5 + $0xa0] sm:$0xff]
      %v2169 = vld [vmem:[%s5 + $0xa8] sm:$0xff]
      %v2170 = vld [vmem:[%s5 + $0xb0] sm:$0xff]
      %v2171 = vld [vmem:[%s5 + $0xb8] sm:$0xff]
      %v2172 = vld [vmem:[%s5 + $0xc0] sm:$0xff]
      %v2173 = vld [vmem:[%s5 + $0xc8] sm:$0xff]
      %v2174 = vld [vmem:[%s5 + $0xd0] sm:$0xff]
      %v2175 = vld [vmem:[%s5 + $0xd8] sm:$0xff]
      %v2176 = vld [vmem:[%s5 + $0xe0] sm:$0xff]
      %v2177 = vld [vmem:[%s5 + $0xe8] sm:$0xff]
      %v2178 = vld [vmem:[%s5 + $0xf0] sm:$0xff]
      %v2179 = vld [vmem:[%s5 + $0xf8] sm:$0xff]
      %2212 = vrot.lane.b32.xlu0 %v2116, 96
      %v2213 = vpop.permute.xlu0 %2212
      %2214 = vrot.lane.b32.xlu0 %v2117, 96
      %v2215 = vpop.permute.xlu0 %2214
      %2216 = vrot.lane.b32.xlu0 %v2118, 96
      %v2217 = vpop.permute.xlu0 %2216
      %2218 = vrot.lane.b32.xlu0 %v2119, 96
      %v2219 = vpop.permute.xlu0 %2218
      %2220 = vrot.lane.b32.xlu0 %v2120, 96
      %v2221 = vpop.permute.xlu0 %2220
      %2222 = vrot.lane.b32.xlu0 %v2121, 96
      %v2223 = vpop.permute.xlu0 %2222
      %2224 = vrot.lane.b32.xlu0 %v2122, 96
      %v2225 = vpop.permute.xlu0 %2224
      %2226 = vrot.lane.b32.xlu0 %v2123, 96
      %v2227 = vpop.permute.xlu0 %2226
      %2228 = vrot.lane.b32.xlu0 %v2124, 96
      %v2229 = vpop.permute.xlu0 %2228
      %2230 = vrot.lane.b32.xlu0 %v2125, 96
      %v2231 = vpop.permute.xlu0 %2230
      %2232 = vrot.lane.b32.xlu0 %v2126, 96
      %v2233 = vpop.permute.xlu0 %2232
      %2234 = vrot.lane.b32.xlu0 %v2127, 96
      %v2235 = vpop.permute.xlu0 %2234
      %2236 = vrot.lane.b32.xlu0 %v2128, 96
      %v2237 = vpop.permute.xlu0 %2236
      %2238 = vrot.lane.b32.xlu0 %v2129, 96
      %v2239 = vpop.permute.xlu0 %2238
      %2240 = vrot.lane.b32.xlu0 %v2130, 96
      %v2241 = vpop.permute.xlu0 %2240
      %2242 = vrot.lane.b32.xlu0 %v2131, 96
      %v2243 = vpop.permute.xlu0 %2242
      %2244 = vrot.lane.b32.xlu0 %v2132, 96
      %v2245 = vpop.permute.xlu0 %2244
      %2246 = vrot.lane.b32.xlu0 %v2133, 96
      %v2247 = vpop.permute.xlu0 %2246
      %2248 = vrot.lane.b32.xlu0 %v2134, 96
      %v2249 = vpop.permute.xlu0 %2248
      %2250 = vrot.lane.b32.xlu0 %v2135, 96
      %v2251 = vpop.permute.xlu0 %2250
      %2252 = vrot.lane.b32.xlu0 %v2136, 96
      %v2253 = vpop.permute.xlu0 %2252
      %2254 = vrot.lane.b32.xlu0 %v2137, 96
      %v2255 = vpop.permute.xlu0 %2254
      %2256 = vrot.lane.b32.xlu0 %v2138, 96
      %v2257 = vpop.permute.xlu0 %2256
      %2258 = vrot.lane.b32.xlu0 %v2139, 96
      %v2259 = vpop.permute.xlu0 %2258
      %2260 = vrot.lane.b32.xlu0 %v2140, 96
      %v2261 = vpop.permute.xlu0 %2260
      %2262 = vrot.lane.b32.xlu0 %v2141, 96
      %v2263 = vpop.permute.xlu0 %2262
      %2264 = vrot.lane.b32.xlu0 %v2142, 96
      %v2265 = vpop.permute.xlu0 %2264
      %2266 = vrot.lane.b32.xlu0 %v2143, 96
      %v2267 = vpop.permute.xlu0 %2266
      %2268 = vrot.lane.b32.xlu0 %v2144, 96
      %v2269 = vpop.permute.xlu0 %2268
      %2270 = vrot.lane.b32.xlu0 %v2145, 96
      %v2271 = vpop.permute.xlu0 %2270
      %2272 = vrot.lane.b32.xlu0 %v2146, 96
      %v2273 = vpop.permute.xlu0 %2272
      %2274 = vrot.lane.b32.xlu0 %v2147, 96
      %v2275 = vpop.permute.xlu0 %2274
      %v2308 = vmul.f32 %v2148, %v2213
      %v2309 = vmul.f32 %v2149, %v2215
      %v2310 = vmul.f32 %v2150, %v2217
      %v2311 = vmul.f32 %v2151, %v2219
      %v2312 = vmul.f32 %v2152, %v2221
      %v2313 = vmul.f32 %v2153, %v2223
      %v2314 = vmul.f32 %v2154, %v2225
      %v2315 = vmul.f32 %v2155, %v2227
      %v2316 = vmul.f32 %v2156, %v2229
      %v2317 = vmul.f32 %v2157, %v2231
      %v2318 = vmul.f32 %v2158, %v2233
      %v2319 = vmul.f32 %v2159, %v2235
      %v2320 = vmul.f32 %v2160, %v2237
      %v2321 = vmul.f32 %v2161, %v2239
      %v2322 = vmul.f32 %v2162, %v2241
      %v2323 = vmul.f32 %v2163, %v2243
      %v2324 = vmul.f32 %v2164, %v2245
      %v2325 = vmul.f32 %v2165, %v2247
      %v2326 = vmul.f32 %v2166, %v2249
      %v2327 = vmul.f32 %v2167, %v2251
      %v2328 = vmul.f32 %v2168, %v2253
      %v2329 = vmul.f32 %v2169, %v2255
      %v2330 = vmul.f32 %v2170, %v2257
      %v2331 = vmul.f32 %v2171, %v2259
      %v2332 = vmul.f32 %v2172, %v2261
      %v2333 = vmul.f32 %v2173, %v2263
      %v2334 = vmul.f32 %v2174, %v2265
      %v2335 = vmul.f32 %v2175, %v2267
      %v2336 = vmul.f32 %v2176, %v2269
      %v2337 = vmul.f32 %v2177, %v2271
      %v2338 = vmul.f32 %v2178, %v2273
      %v2339 = vmul.f32 %v2179, %v2275
      %2372 = vrot.lane.b32.xlu0 %v2308, 96
      %v2373 = vpop.permute.xlu0 %2372
      %2374 = vrot.lane.b32.xlu0 %v2309, 96
      %v2375 = vpop.permute.xlu0 %2374
      %2376 = vrot.lane.b32.xlu0 %v2310, 96
      %v2377 = vpop.permute.xlu0 %2376
      %2378 = vrot.lane.b32.xlu0 %v2311, 96
      %v2379 = vpop.permute.xlu0 %2378
      %2380 = vrot.lane.b32.xlu0 %v2312, 96
      %v2381 = vpop.permute.xlu0 %2380
      %2382 = vrot.lane.b32.xlu0 %v2313, 96
      %v2383 = vpop.permute.xlu0 %2382
      %2384 = vrot.lane.b32.xlu0 %v2314, 96
      %v2385 = vpop.permute.xlu0 %2384
      %2386 = vrot.lane.b32.xlu0 %v2315, 96
      %v2387 = vpop.permute.xlu0 %2386
      %2388 = vrot.lane.b32.xlu0 %v2316, 96
      %v2389 = vpop.permute.xlu0 %2388
      %2390 = vrot.lane.b32.xlu0 %v2317, 96
      %v2391 = vpop.permute.xlu0 %2390
      %2392 = vrot.lane.b32.xlu0 %v2318, 96
      %v2393 = vpop.permute.xlu0 %2392
      %2394 = vrot.lane.b32.xlu0 %v2319, 96
      %v2395 = vpop.permute.xlu0 %2394
      %2396 = vrot.lane.b32.xlu0 %v2320, 96
      %v2397 = vpop.permute.xlu0 %2396
      %2398 = vrot.lane.b32.xlu0 %v2321, 96
      %v2399 = vpop.permute.xlu0 %2398
      %2400 = vrot.lane.b32.xlu0 %v2322, 96
      %v2401 = vpop.permute.xlu0 %2400
      %2402 = vrot.lane.b32.xlu0 %v2323, 96
      %v2403 = vpop.permute.xlu0 %2402
      %2404 = vrot.lane.b32.xlu0 %v2324, 96
      %v2405 = vpop.permute.xlu0 %2404
      %2406 = vrot.lane.b32.xlu0 %v2325, 96
      %v2407 = vpop.permute.xlu0 %2406
      %2408 = vrot.lane.b32.xlu0 %v2326, 96
      %v2409 = vpop.permute.xlu0 %2408
      %2410 = vrot.lane.b32.xlu0 %v2327, 96
      %v2411 = vpop.permute.xlu0 %2410
      %2412 = vrot.lane.b32.xlu0 %v2328, 96
      %v2413 = vpop.permute.xlu0 %2412
      %2414 = vrot.lane.b32.xlu0 %v2329, 96
      %v2415 = vpop.permute.xlu0 %2414
      %2416 = vrot.lane.b32.xlu0 %v2330, 96
      %v2417 = vpop.permute.xlu0 %2416
      %2418 = vrot.lane.b32.xlu0 %v2331, 96
      %v2419 = vpop.permute.xlu0 %2418
      %2420 = vrot.lane.b32.xlu0 %v2332, 96
      %v2421 = vpop.permute.xlu0 %2420
      %2422 = vrot.lane.b32.xlu0 %v2333, 96
      %v2423 = vpop.permute.xlu0 %2422
      %2424 = vrot.lane.b32.xlu0 %v2334, 96
      %v2425 = vpop.permute.xlu0 %2424
      %2426 = vrot.lane.b32.xlu0 %v2335, 96
      %v2427 = vpop.permute.xlu0 %2426
      %2428 = vrot.lane.b32.xlu0 %v2336, 96
      %v2429 = vpop.permute.xlu0 %2428
      %2430 = vrot.lane.b32.xlu0 %v2337, 96
      %v2431 = vpop.permute.xlu0 %2430
      %2432 = vrot.lane.b32.xlu0 %v2338, 96
      %v2433 = vpop.permute.xlu0 %2432
      %2434 = vrot.lane.b32.xlu0 %v2339, 96
      %v2435 = vpop.permute.xlu0 %2434
      %v2468 = vadd.f32 %v996, %v2373
      %v2469 = vadd.f32 %v999, %v2375
      %v2470 = vadd.f32 %v1004, %v2377
      %v2471 = vadd.f32 %v1007, %v2379
      %v2472 = vadd.f32 %v1012, %v2381
      %v2473 = vadd.f32 %v1015, %v2383
      %v2474 = vadd.f32 %v1020, %v2385
      %v2475 = vadd.f32 %v1023, %v2387
      %v2476 = vadd.f32 %v1028, %v2389
      %v2477 = vadd.f32 %v1031, %v2391
      %v2478 = vadd.f32 %v1036, %v2393
      %v2479 = vadd.f32 %v1039, %v2395
      %v2480 = vadd.f32 %v1044, %v2397
      %v2481 = vadd.f32 %v1047, %v2399
      %v2482 = vadd.f32 %v1052, %v2401
      %v2483 = vadd.f32 %v1055, %v2403
      %v2484 = vadd.f32 %v1060, %v2405
      %v2485 = vadd.f32 %v1063, %v2407
      %v2486 = vadd.f32 %v1068, %v2409
      %v2487 = vadd.f32 %v1071, %v2411
      %v2488 = vadd.f32 %v1076, %v2413
      %v2489 = vadd.f32 %v1079, %v2415
      %v2490 = vadd.f32 %v1084, %v2417
      %v2491 = vadd.f32 %v1087, %v2419
      %v2492 = vadd.f32 %v1092, %v2421
      %v2493 = vadd.f32 %v1095, %v2423
      %v2494 = vadd.f32 %v1100, %v2425
      %v2495 = vadd.f32 %v1103, %v2427
      %v2496 = vadd.f32 %v1108, %v2429
      %v2497 = vadd.f32 %v1111, %v2431
      %v2498 = vadd.f32 %v1116, %v2433
      %v2499 = vadd.f32 %v1119, %v2435
      %v2500 = vxor.u32 %v2468, 2147483648
      %v2501 = vxor.u32 %v2469, 2147483648
      %v2502 = vxor.u32 %v2470, 2147483648
      %v2503 = vxor.u32 %v2471, 2147483648
      %v2504 = vxor.u32 %v2472, 2147483648
      %v2505 = vxor.u32 %v2473, 2147483648
      %v2506 = vxor.u32 %v2474, 2147483648
      %v2507 = vxor.u32 %v2475, 2147483648
      %v2508 = vxor.u32 %v2476, 2147483648
      %v2509 = vxor.u32 %v2477, 2147483648
      %v2510 = vxor.u32 %v2478, 2147483648
      %v2511 = vxor.u32 %v2479, 2147483648
      %v2512 = vxor.u32 %v2480, 2147483648
      %v2513 = vxor.u32 %v2481, 2147483648
      %v2514 = vxor.u32 %v2482, 2147483648
      %v2515 = vxor.u32 %v2483, 2147483648
      %v2516 = vxor.u32 %v2484, 2147483648
      %v2517 = vxor.u32 %v2485, 2147483648
      %v2518 = vxor.u32 %v2486, 2147483648
      %v2519 = vxor.u32 %v2487, 2147483648
      %v2520 = vxor.u32 %v2488, 2147483648
      %v2521 = vxor.u32 %v2489, 2147483648
      %v2522 = vxor.u32 %v2490, 2147483648
      %v2523 = vxor.u32 %v2491, 2147483648
      %v2524 = vxor.u32 %v2492, 2147483648
      %v2525 = vxor.u32 %v2493, 2147483648
      %v2526 = vxor.u32 %v2494, 2147483648
      %v2527 = vxor.u32 %v2495, 2147483648
      %v2528 = vxor.u32 %v2496, 2147483648
      %v2529 = vxor.u32 %v2497, 2147483648
      %v2530 = vxor.u32 %v2498, 2147483648
      %v2531 = vxor.u32 %v2499, 2147483648
      %v2532 = vmul.f32 %v2500, 1.442695
      %v2533 = vpow.pop %v2532
      %v2534 = vmul.f32 %v2501, 1.442695
      %v2535 = vpow.pop %v2534
      %v2536 = vmul.f32 %v2502, 1.442695
      %v2537 = vpow.pop %v2536
      %v2538 = vmul.f32 %v2503, 1.442695
      %v2539 = vpow.pop %v2538
      %v2540 = vmul.f32 %v2504, 1.442695
      %v2541 = vpow.pop %v2540
      %v2542 = vmul.f32 %v2505, 1.442695
      %v2543 = vpow.pop %v2542
      %v2544 = vmul.f32 %v2506, 1.442695
      %v2545 = vpow.pop %v2544
      %v2546 = vmul.f32 %v2507, 1.442695
      %v2547 = vpow.pop %v2546
      %v2548 = vmul.f32 %v2508, 1.442695
      %v2549 = vpow.pop %v2548
      %v2550 = vmul.f32 %v2509, 1.442695
      %v2551 = vpow.pop %v2550
      %v2552 = vmul.f32 %v2510, 1.442695
      %v2553 = vpow.pop %v2552
      %v2554 = vmul.f32 %v2511, 1.442695
      %v2555 = vpow.pop %v2554
      %v2556 = vmul.f32 %v2512, 1.442695
      %v2557 = vpow.pop %v2556
      %v2558 = vmul.f32 %v2513, 1.442695
      %v2559 = vpow.pop %v2558
      %v2560 = vmul.f32 %v2514, 1.442695
      %v2561 = vpow.pop %v2560
      %v2562 = vmul.f32 %v2515, 1.442695
      %v2563 = vpow.pop %v2562
      %v2564 = vmul.f32 %v2516, 1.442695
      %v2565 = vpow.pop %v2564
      %v2566 = vmul.f32 %v2517, 1.442695
      %v2567 = vpow.pop %v2566
      %v2568 = vmul.f32 %v2518, 1.442695
      %v2569 = vpow.pop %v2568
      %v2570 = vmul.f32 %v2519, 1.442695
      %v2571 = vpow.pop %v2570
      %v2572 = vmul.f32 %v2520, 1.442695
      %v2573 = vpow.pop %v2572
      %v2574 = vmul.f32 %v2521, 1.442695
      %v2575 = vpow.pop %v2574
      %v2576 = vmul.f32 %v2522, 1.442695
      %v2577 = vpow.pop %v2576
      %v2578 = vmul.f32 %v2523, 1.442695
      %v2579 = vpow.pop %v2578
      %v2580 = vmul.f32 %v2524, 1.442695
      %v2581 = vpow.pop %v2580
      %v2582 = vmul.f32 %v2525, 1.442695
      %v2583 = vpow.pop %v2582
      %v2584 = vmul.f32 %v2526, 1.442695
      %v2585 = vpow.pop %v2584
      %v2586 = vmul.f32 %v2527, 1.442695
      %v2587 = vpow.pop %v2586
      %v2588 = vmul.f32 %v2528, 1.442695
      %v2589 = vpow.pop %v2588
      %v2590 = vmul.f32 %v2529, 1.442695
      %v2591 = vpow.pop %v2590
      %v2592 = vmul.f32 %v2530, 1.442695
      %v2593 = vpow.pop %v2592
      %v2594 = vmul.f32 %v2531, 1.442695
      %v2595 = vpow.pop %v2594
      %v2596 = vadd.f32 %v2533, 1.0
      %v2597 = vadd.f32 %v2535, 1.0
      %v2598 = vadd.f32 %v2537, 1.0
      %v2599 = vadd.f32 %v2539, 1.0
      %v2600 = vadd.f32 %v2541, 1.0
      %v2601 = vadd.f32 %v2543, 1.0
      %v2602 = vadd.f32 %v2545, 1.0
      %v2603 = vadd.f32 %v2547, 1.0
      %v2604 = vadd.f32 %v2549, 1.0
      %v2605 = vadd.f32 %v2551, 1.0
      %v2606 = vadd.f32 %v2553, 1.0
      %v2607 = vadd.f32 %v2555, 1.0
      %v2608 = vadd.f32 %v2557, 1.0
      %v2609 = vadd.f32 %v2559, 1.0
      %v2610 = vadd.f32 %v2561, 1.0
      %v2611 = vadd.f32 %v2563, 1.0
      %v2612 = vadd.f32 %v2565, 1.0
      %v2613 = vadd.f32 %v2567, 1.0
      %v2614 = vadd.f32 %v2569, 1.0
      %v2615 = vadd.f32 %v2571, 1.0
      %v2616 = vadd.f32 %v2573, 1.0
      %v2617 = vadd.f32 %v2575, 1.0
      %v2618 = vadd.f32 %v2577, 1.0
      %v2619 = vadd.f32 %v2579, 1.0
      %v2620 = vadd.f32 %v2581, 1.0
      %v2621 = vadd.f32 %v2583, 1.0
      %v2622 = vadd.f32 %v2585, 1.0
      %v2623 = vadd.f32 %v2587, 1.0
      %v2624 = vadd.f32 %v2589, 1.0
      %v2625 = vadd.f32 %v2591, 1.0
      %v2626 = vadd.f32 %v2593, 1.0
      %v2627 = vadd.f32 %v2595, 1.0
      %v2628 = vrcp.pop %v2596
      %v2629 = vmul.f32 1.0, %v2628
      %v2630 = vrcp.pop %v2597
      %v2631 = vmul.f32 1.0, %v2630
      %v2632 = vrcp.pop %v2598
      %v2633 = vmul.f32 1.0, %v2632
      %v2634 = vrcp.pop %v2599
      %v2635 = vmul.f32 1.0, %v2634
      %v2636 = vrcp.pop %v2600
      %v2637 = vmul.f32 1.0, %v2636
      %v2638 = vrcp.pop %v2601
      %v2639 = vmul.f32 1.0, %v2638
      %v2640 = vrcp.pop %v2602
      %v2641 = vmul.f32 1.0, %v2640
      %v2642 = vrcp.pop %v2603
      %v2643 = vmul.f32 1.0, %v2642
      %v2644 = vrcp.pop %v2604
      %v2645 = vmul.f32 1.0, %v2644
      %v2646 = vrcp.pop %v2605
      %v2647 = vmul.f32 1.0, %v2646
      %v2648 = vrcp.pop %v2606
      %v2649 = vmul.f32 1.0, %v2648
      %v2650 = vrcp.pop %v2607
      %v2651 = vmul.f32 1.0, %v2650
      %v2652 = vrcp.pop %v2608
      %v2653 = vmul.f32 1.0, %v2652
      %v2654 = vrcp.pop %v2609
      %v2655 = vmul.f32 1.0, %v2654
      %v2656 = vrcp.pop %v2610
      %v2657 = vmul.f32 1.0, %v2656
      %v2658 = vrcp.pop %v2611
      %v2659 = vmul.f32 1.0, %v2658
      %v2660 = vrcp.pop %v2612
      %v2661 = vmul.f32 1.0, %v2660
      %v2662 = vrcp.pop %v2613
      %v2663 = vmul.f32 1.0, %v2662
      %v2664 = vrcp.pop %v2614
      %v2665 = vmul.f32 1.0, %v2664
      %v2666 = vrcp.pop %v2615
      %v2667 = vmul.f32 1.0, %v2666
      %v2668 = vrcp.pop %v2616
      %v2669 = vmul.f32 1.0, %v2668
      %v2670 = vrcp.pop %v2617
      %v2671 = vmul.f32 1.0, %v2670
      %v2672 = vrcp.pop %v2618
      %v2673 = vmul.f32 1.0, %v2672
      %v2674 = vrcp.pop %v2619
      %v2675 = vmul.f32 1.0, %v2674
      %v2676 = vrcp.pop %v2620
      %v2677 = vmul.f32 1.0, %v2676
      %v2678 = vrcp.pop %v2621
      %v2679 = vmul.f32 1.0, %v2678
      %v2680 = vrcp.pop %v2622
      %v2681 = vmul.f32 1.0, %v2680
      %v2682 = vrcp.pop %v2623
      %v2683 = vmul.f32 1.0, %v2682
      %v2684 = vrcp.pop %v2624
      %v2685 = vmul.f32 1.0, %v2684
      %v2686 = vrcp.pop %v2625
      %v2687 = vmul.f32 1.0, %v2686
      %v2688 = vrcp.pop %v2626
      %v2689 = vmul.f32 1.0, %v2688
      %v2690 = vrcp.pop %v2627
      %v2691 = vmul.f32 1.0, %v2690
      %v2692 = vtanh.pop %v2116
      %v2693 = vtanh.pop %v2117
      %v2694 = vtanh.pop %v2118
      %v2695 = vtanh.pop %v2119
      %v2696 = vtanh.pop %v2120
      %v2697 = vtanh.pop %v2121
      %v2698 = vtanh.pop %v2122
      %v2699 = vtanh.pop %v2123
      %v2700 = vtanh.pop %v2124
      %v2701 = vtanh.pop %v2125
      %v2702 = vtanh.pop %v2126
      %v2703 = vtanh.pop %v2127
      %v2704 = vtanh.pop %v2128
      %v2705 = vtanh.pop %v2129
      %v2706 = vtanh.pop %v2130
      %v2707 = vtanh.pop %v2131
      %v2708 = vtanh.pop %v2132
      %v2709 = vtanh.pop %v2133
      %v2710 = vtanh.pop %v2134
      %v2711 = vtanh.pop %v2135
      %v2712 = vtanh.pop %v2136
      %v2713 = vtanh.pop %v2137
      %v2714 = vtanh.pop %v2138
      %v2715 = vtanh.pop %v2139
      %v2716 = vtanh.pop %v2140
      %v2717 = vtanh.pop %v2141
      %v2718 = vtanh.pop %v2142
      %v2719 = vtanh.pop %v2143
      %v2720 = vtanh.pop %v2144
      %v2721 = vtanh.pop %v2145
      %v2722 = vtanh.pop %v2146
      %v2723 = vtanh.pop %v2147
      %2756 = vrot.lane.b32.xlu0 %v2692, 64
      %v2757 = vpop.permute.xlu0 %2756
      %2758 = vrot.lane.b32.xlu0 %v2693, 64
      %v2759 = vpop.permute.xlu0 %2758
      %2760 = vrot.lane.b32.xlu0 %v2694, 64
      %v2761 = vpop.permute.xlu0 %2760
      %2762 = vrot.lane.b32.xlu0 %v2695, 64
      %v2763 = vpop.permute.xlu0 %2762
      %2764 = vrot.lane.b32.xlu0 %v2696, 64
      %v2765 = vpop.permute.xlu0 %2764
      %2766 = vrot.lane.b32.xlu0 %v2697, 64
      %v2767 = vpop.permute.xlu0 %2766
      %2768 = vrot.lane.b32.xlu0 %v2698, 64
      %v2769 = vpop.permute.xlu0 %2768
      %2770 = vrot.lane.b32.xlu0 %v2699, 64
      %v2771 = vpop.permute.xlu0 %2770
      %2772 = vrot.lane.b32.xlu0 %v2700, 64
      %v2773 = vpop.permute.xlu0 %2772
      %2774 = vrot.lane.b32.xlu0 %v2701, 64
      %v2775 = vpop.permute.xlu0 %2774
      %2776 = vrot.lane.b32.xlu0 %v2702, 64
      %v2777 = vpop.permute.xlu0 %2776
      %2778 = vrot.lane.b32.xlu0 %v2703, 64
      %v2779 = vpop.permute.xlu0 %2778
      %2780 = vrot.lane.b32.xlu0 %v2704, 64
      %v2781 = vpop.permute.xlu0 %2780
      %2782 = vrot.lane.b32.xlu0 %v2705, 64
      %v2783 = vpop.permute.xlu0 %2782
      %2784 = vrot.lane.b32.xlu0 %v2706, 64
      %v2785 = vpop.permute.xlu0 %2784
      %2786 = vrot.lane.b32.xlu0 %v2707, 64
      %v2787 = vpop.permute.xlu0 %2786
      %2788 = vrot.lane.b32.xlu0 %v2708, 64
      %v2789 = vpop.permute.xlu0 %2788
      %2790 = vrot.lane.b32.xlu0 %v2709, 64
      %v2791 = vpop.permute.xlu0 %2790
      %2792 = vrot.lane.b32.xlu0 %v2710, 64
      %v2793 = vpop.permute.xlu0 %2792
      %2794 = vrot.lane.b32.xlu0 %v2711, 64
      %v2795 = vpop.permute.xlu0 %2794
      %2796 = vrot.lane.b32.xlu0 %v2712, 64
      %v2797 = vpop.permute.xlu0 %2796
      %2798 = vrot.lane.b32.xlu0 %v2713, 64
      %v2799 = vpop.permute.xlu0 %2798
      %2800 = vrot.lane.b32.xlu0 %v2714, 64
      %v2801 = vpop.permute.xlu0 %2800
      %2802 = vrot.lane.b32.xlu0 %v2715, 64
      %v2803 = vpop.permute.xlu0 %2802
      %2804 = vrot.lane.b32.xlu0 %v2716, 64
      %v2805 = vpop.permute.xlu0 %2804
      %2806 = vrot.lane.b32.xlu0 %v2717, 64
      %v2807 = vpop.permute.xlu0 %2806
      %2808 = vrot.lane.b32.xlu0 %v2718, 64
      %v2809 = vpop.permute.xlu0 %2808
      %2810 = vrot.lane.b32.xlu0 %v2719, 64
      %v2811 = vpop.permute.xlu0 %2810
      %2812 = vrot.lane.b32.xlu0 %v2720, 64
      %v2813 = vpop.permute.xlu0 %2812
      %2814 = vrot.lane.b32.xlu0 %v2721, 64
      %v2815 = vpop.permute.xlu0 %2814
      %2816 = vrot.lane.b32.xlu0 %v2722, 64
      %v2817 = vpop.permute.xlu0 %2816
      %2818 = vrot.lane.b32.xlu0 %v2723, 64
      %v2819 = vpop.permute.xlu0 %2818
      %v2852 = vmul.f32 %v2629, %v2757
      %v2853 = vmul.f32 %v2631, %v2759
      %v2854 = vmul.f32 %v2633, %v2761
      %v2855 = vmul.f32 %v2635, %v2763
      %v2856 = vmul.f32 %v2637, %v2765
      %v2857 = vmul.f32 %v2639, %v2767
      %v2858 = vmul.f32 %v2641, %v2769
      %v2859 = vmul.f32 %v2643, %v2771
      %v2860 = vmul.f32 %v2645, %v2773
      %v2861 = vmul.f32 %v2647, %v2775
      %v2862 = vmul.f32 %v2649, %v2777
      %v2863 = vmul.f32 %v2651, %v2779
      %v2864 = vmul.f32 %v2653, %v2781
      %v2865 = vmul.f32 %v2655, %v2783
      %v2866 = vmul.f32 %v2657, %v2785
      %v2867 = vmul.f32 %v2659, %v2787
      %v2868 = vmul.f32 %v2661, %v2789
      %v2869 = vmul.f32 %v2663, %v2791
      %v2870 = vmul.f32 %v2665, %v2793
      %v2871 = vmul.f32 %v2667, %v2795
      %v2872 = vmul.f32 %v2669, %v2797
      %v2873 = vmul.f32 %v2671, %v2799
      %v2874 = vmul.f32 %v2673, %v2801
      %v2875 = vmul.f32 %v2675, %v2803
      %v2876 = vmul.f32 %v2677, %v2805
      %v2877 = vmul.f32 %v2679, %v2807
      %v2878 = vmul.f32 %v2681, %v2809
      %v2879 = vmul.f32 %v2683, %v2811
      %v2880 = vmul.f32 %v2685, %v2813
      %v2881 = vmul.f32 %v2687, %v2815
      %v2882 = vmul.f32 %v2689, %v2817
      %v2883 = vmul.f32 %v2691, %v2819
      %2916 = vrot.lane.b32.xlu0 %v2852, 32
      %v2917 = vpop.permute.xlu0 %2916
      %2918 = vrot.lane.b32.xlu0 %v2853, 32
      %v2919 = vpop.permute.xlu0 %2918
      %2920 = vrot.lane.b32.xlu0 %v2854, 32
      %v2921 = vpop.permute.xlu0 %2920
      %2922 = vrot.lane.b32.xlu0 %v2855, 32
      %v2923 = vpop.permute.xlu0 %2922
      %2924 = vrot.lane.b32.xlu0 %v2856, 32
      %v2925 = vpop.permute.xlu0 %2924
      %2926 = vrot.lane.b32.xlu0 %v2857, 32
      %v2927 = vpop.permute.xlu0 %2926
      %2928 = vrot.lane.b32.xlu0 %v2858, 32
      %v2929 = vpop.permute.xlu0 %2928
      %2930 = vrot.lane.b32.xlu0 %v2859, 32
      %v2931 = vpop.permute.xlu0 %2930
      %2932 = vrot.lane.b32.xlu0 %v2860, 32
      %v2933 = vpop.permute.xlu0 %2932
      %2934 = vrot.lane.b32.xlu0 %v2861, 32
      %v2935 = vpop.permute.xlu0 %2934
      %2936 = vrot.lane.b32.xlu0 %v2862, 32
      %v2937 = vpop.permute.xlu0 %2936
      %2938 = vrot.lane.b32.xlu0 %v2863, 32
      %v2939 = vpop.permute.xlu0 %2938
      %2940 = vrot.lane.b32.xlu0 %v2864, 32
      %v2941 = vpop.permute.xlu0 %2940
      %2942 = vrot.lane.b32.xlu0 %v2865, 32
      %v2943 = vpop.permute.xlu0 %2942
      %2944 = vrot.lane.b32.xlu0 %v2866, 32
      %v2945 = vpop.permute.xlu0 %2944
      %2946 = vrot.lane.b32.xlu0 %v2867, 32
      %v2947 = vpop.permute.xlu0 %2946
      %2948 = vrot.lane.b32.xlu0 %v2868, 32
      %v2949 = vpop.permute.xlu0 %2948
      %2950 = vrot.lane.b32.xlu0 %v2869, 32
      %v2951 = vpop.permute.xlu0 %2950
      %2952 = vrot.lane.b32.xlu0 %v2870, 32
      %v2953 = vpop.permute.xlu0 %2952
      %2954 = vrot.lane.b32.xlu0 %v2871, 32
      %v2955 = vpop.permute.xlu0 %2954
      %2956 = vrot.lane.b32.xlu0 %v2872, 32
      %v2957 = vpop.permute.xlu0 %2956
      %2958 = vrot.lane.b32.xlu0 %v2873, 32
      %v2959 = vpop.permute.xlu0 %2958
      %2960 = vrot.lane.b32.xlu0 %v2874, 32
      %v2961 = vpop.permute.xlu0 %2960
      %2962 = vrot.lane.b32.xlu0 %v2875, 32
      %v2963 = vpop.permute.xlu0 %2962
      %2964 = vrot.lane.b32.xlu0 %v2876, 32
      %v2965 = vpop.permute.xlu0 %2964
      %2966 = vrot.lane.b32.xlu0 %v2877, 32
      %v2967 = vpop.permute.xlu0 %2966
      %2968 = vrot.lane.b32.xlu0 %v2878, 32
      %v2969 = vpop.permute.xlu0 %2968
      %2970 = vrot.lane.b32.xlu0 %v2879, 32
      %v2971 = vpop.permute.xlu0 %2970
      %2972 = vrot.lane.b32.xlu0 %v2880, 32
      %v2973 = vpop.permute.xlu0 %2972
      %2974 = vrot.lane.b32.xlu0 %v2881, 32
      %v2975 = vpop.permute.xlu0 %2974
      %2976 = vrot.lane.b32.xlu0 %v2882, 32
      %v2977 = vpop.permute.xlu0 %2976
      %2978 = vrot.lane.b32.xlu0 %v2883, 32
      %v2979 = vpop.permute.xlu0 %2978
      %v3012 = vsel %vm1378, %v2917, %v2116
      %v3013 = vsel %vm1378, %v2919, %v2117
      %v3014 = vsel %vm1378, %v2921, %v2118
      %v3015 = vsel %vm1378, %v2923, %v2119
      %v3016 = vsel %vm1378, %v2925, %v2120
      %v3017 = vsel %vm1378, %v2927, %v2121
      %v3018 = vsel %vm1378, %v2929, %v2122
      %v3019 = vsel %vm1378, %v2931, %v2123
      %v3020 = vsel %vm1378, %v2933, %v2124
      %v3021 = vsel %vm1378, %v2935, %v2125
      %v3022 = vsel %vm1378, %v2937, %v2126
      %v3023 = vsel %vm1378, %v2939, %v2127
      %v3024 = vsel %vm1378, %v2941, %v2128
      %v3025 = vsel %vm1378, %v2943, %v2129
      %v3026 = vsel %vm1378, %v2945, %v2130
      %v3027 = vsel %vm1378, %v2947, %v2131
      %v3028 = vsel %vm1378, %v2949, %v2132
      %v3029 = vsel %vm1378, %v2951, %v2133
      %v3030 = vsel %vm1378, %v2953, %v2134
      %v3031 = vsel %vm1378, %v2955, %v2135
      %v3032 = vsel %vm1378, %v2957, %v2136
      %v3033 = vsel %vm1378, %v2959, %v2137
      %v3034 = vsel %vm1378, %v2961, %v2138
      %v3035 = vsel %vm1378, %v2963, %v2139
      %v3036 = vsel %vm1378, %v2965, %v2140
      %v3037 = vsel %vm1378, %v2967, %v2141
      %v3038 = vsel %vm1378, %v2969, %v2142
      %v3039 = vsel %vm1378, %v2971, %v2143
      %v3040 = vsel %vm1378, %v2973, %v2144
      %v3041 = vsel %vm1378, %v2975, %v2145
      %v3042 = vsel %vm1378, %v2977, %v2146
      %v3043 = vsel %vm1378, %v2979, %v2147
      %3044 = vst.msk [vmem:[%s278] sm:$0xff] %vm1411, %v3012
      %3045 = vst.msk [vmem:[%s278 + $0x8] sm:$0xff] %vm1411, %v3013
      %3046 = vst.msk [vmem:[%s278 + $0x10] sm:$0xff] %vm1411, %v3014
      %3047 = vst.msk [vmem:[%s278 + $0x18] sm:$0xff] %vm1411, %v3015
      %3048 = vst.msk [vmem:[%s278 + $0x20] sm:$0xff] %vm1411, %v3016
      %3049 = vst.msk [vmem:[%s278 + $0x28] sm:$0xff] %vm1411, %v3017
      %3050 = vst.msk [vmem:[%s278 + $0x30] sm:$0xff] %vm1411, %v3018
      %3051 = vst.msk [vmem:[%s278 + $0x38] sm:$0xff] %vm1411, %v3019
      %3052 = vst.msk [vmem:[%s278 + $0x40] sm:$0xff] %vm1411, %v3020
      %3053 = vst.msk [vmem:[%s278 + $0x48] sm:$0xff] %vm1411, %v3021
      %3054 = vst.msk [vmem:[%s278 + $0x50] sm:$0xff] %vm1411, %v3022
      %3055 = vst.msk [vmem:[%s278 + $0x58] sm:$0xff] %vm1411, %v3023
      %3056 = vst.msk [vmem:[%s278 + $0x60] sm:$0xff] %vm1411, %v3024
      %3057 = vst.msk [vmem:[%s278 + $0x68] sm:$0xff] %vm1411, %v3025
      %3058 = vst.msk [vmem:[%s278 + $0x70] sm:$0xff] %vm1411, %v3026
      %3059 = vst.msk [vmem:[%s278 + $0x78] sm:$0xff] %vm1411, %v3027
      %3060 = vst.msk [vmem:[%s278 + $0x80] sm:$0xff] %vm1411, %v3028
      %3061 = vst.msk [vmem:[%s278 + $0x88] sm:$0xff] %vm1411, %v3029
      %3062 = vst.msk [vmem:[%s278 + $0x90] sm:$0xff] %vm1411, %v3030
      %3063 = vst.msk [vmem:[%s278 + $0x98] sm:$0xff] %vm1411, %v3031
      %3064 = vst.msk [vmem:[%s278 + $0xa0] sm:$0xff] %vm1411, %v3032
      %3065 = vst.msk [vmem:[%s278 + $0xa8] sm:$0xff] %vm1411, %v3033
      %3066 = vst.msk [vmem:[%s278 + $0xb0] sm:$0xff] %vm1411, %v3034
      %3067 = vst.msk [vmem:[%s278 + $0xb8] sm:$0xff] %vm1411, %v3035
      %3068 = vst.msk [vmem:[%s278 + $0xc0] sm:$0xff] %vm1411, %v3036
      %3069 = vst.msk [vmem:[%s278 + $0xc8] sm:$0xff] %vm1411, %v3037
      %3070 = vst.msk [vmem:[%s278 + $0xd0] sm:$0xff] %vm1411, %v3038
      %3071 = vst.msk [vmem:[%s278 + $0xd8] sm:$0xff] %vm1411, %v3039
      %3072 = vst.msk [vmem:[%s278 + $0xe0] sm:$0xff] %vm1411, %v3040
      %3073 = vst.msk [vmem:[%s278 + $0xe8] sm:$0xff] %vm1411, %v3041
      %3074 = vst.msk [vmem:[%s278 + $0xf0] sm:$0xff] %vm1411, %v3042
      %3075 = vst.msk [vmem:[%s278 + $0xf8] sm:$0xff] %vm1411, %v3043
      %s3076 = smul.u32 32, %s17
      %p3077 = scmp.lt.s32.totalorder %s3076, 63
      %s3078 = scalar_select %p3077, %s3076, 63
      %s3079 = smul.addr %s3078, 8
      %s3080 = scalar_lea.vmem %s6, %s3079
      // Predicated region
      $region45: #{convlstm_cell_nchw.1} parent=43 // pred_check
        %p3081 = pneg %p171
      $region46: #{convlstm_cell_nchw.1} parent=43 // pred_check_branch
        %3083 = sbr.rel (%p3081) target = $region48
      $region47: #{convlstm_cell_nchw.1} parent=43 // pred_region
        %s3084 = smul.u32 32, %s17
      $region48: #{convlstm_cell_nchw.1} parent=43 // pred_fallthru
        _
    $region44: #{convlstm_cell_nchw.1} parent=5 // pred_fallthru
      _
    %p3085 = scmp.le.s32.totalorder 2, %s12
    // Predicated region
    $region49: #{convlstm_cell_nchw.1} parent=5 // pred_check
      %p3086 = pneg %p3085
    $region50: #{convlstm_cell_nchw.1} parent=5 // pred_check_branch
      %3088 = sbr.rel (%p3086) target = $region52
    $region51: #{convlstm_cell_nchw.1} parent=5 // pred_region
      %s3089 = ssub.s32 %s12, 2
      // Predicated region
      $region53: #{convlstm_cell_nchw.1} parent=51 // pred_check
        %p3090 = pneg %p177
      $region54: #{convlstm_cell_nchw.1} parent=51 // pred_check_branch
        %3092 = sbr.rel (%p3090) target = $region56
      $region55: #{convlstm_cell_nchw.1} parent=51 // pred_region
        %s3093 = smul.u32 32, %s18
        %p3094 = scmp.lt.s32.totalorder %s3093, 63
        %s3095 = scalar_select %p3094, %s3093, 63
        %s3096 = smul.addr %s3095, 8
        %s3097 = scalar_lea.vmem %s6, %s3096
      $region56: #{convlstm_cell_nchw.1} parent=51 // pred_fallthru
        _
    $region52: #{convlstm_cell_nchw.1} parent=5 // pred_fallthru
      _
  $region6: #{convlstm_cell_nchw.1} parent=0 // loop_footer
    %s16 = sadd.s32 1, %s12
  $region7: #{convlstm_cell_nchw.1} parent=0 // loop_footer_branch
    %11 = sbr.rel target = $region3
  $region8: #{convlstm_cell_nchw.1} parent=0 // loop_exit
    _

</llo_original>
